<compile_context>
chip_gen: v7x
topology: tpu7x:2x2x1
jax: 0.10.0
libtpu: 0.0.40
codegen_flags: <defaults>
</compile_context>

<pallas_src>
import functools

import jax
import jax.numpy as jnp
from jax.experimental import pallas as pl
from jax.experimental.pallas import tpu as pltpu


def _dec_fused_kernel(x_ref, adj_ref, w_ref, b_ref, mut_ref,
                      z_ref, q_ref, zacc_ref, *, alpha):
    """Fused embedding + DEC soft-assignment for one (row-block, k-block) step."""
    # TODO(synk): EGT_DEC's body is not provided in the source module; a
    # graph-conv style stand-in z = adj @ (x @ W) + b is used for the
    # embedding, while the DEC soft-assignment head below is exact.
    k = pl.program_id(1)

    @pl.when(k == 0)
    def _init():
        zacc_ref[...] = jnp.zeros_like(zacc_ref)

    # Re-associated embedding matmul: the deep contraction is over N (the k
    # grid axis), not the tiny F axis.  bf16 operands, f32 accumulation.
    xw = jnp.dot(x_ref[...], w_ref[...], preferred_element_type=jnp.float32)
    zacc_ref[...] += jnp.dot(adj_ref[...], xw.astype(adj_ref.dtype),
                             preferred_element_type=jnp.float32)

    @pl.when(k == pl.num_programs(1) - 1)
    def _finalize():
        z = zacc_ref[...] + b_ref[...]                       # (bn, D) f32
        z_ref[...] = z.astype(z_ref.dtype)

        # dist2 = ||z||^2 + ||mu||^2 - 2 z @ mu^T  (dominant work on the MXU).
        mut = mut_ref[...]                                   # (D, K) f32
        z2 = jnp.sum(z * z, axis=1, keepdims=True)           # (bn, 1)
        mu2 = jnp.sum(mut * mut, axis=0, keepdims=True)      # (1, K)
        zmu = jnp.dot(z, mut, preferred_element_type=jnp.float32)   # (bn, K)
        dist2 = jnp.maximum(z2 + mu2 - 2.0 * zmu, 0.0)

        # q = 1 / (1 + dist2/alpha + 1e-8); approx reciprocal runs on the EUP.
        qn = pl.reciprocal(1.0 + dist2 * (1.0 / alpha) + 1e-08, approx=True)
        # torch: q = q ** (alpha + 1.0) / 2.0 ; the /2.0 is a per-row constant
        # that cancels exactly in the normalization, so it is dropped.  Clamp
        # before log to avoid -inf if q underflows for far-away points.
        qn = jnp.exp((alpha + 1.0) * jnp.log(jnp.maximum(qn, 1e-30)))
        # Exact row normalization keeps each row summing to 1 to f32 precision.
        q = qn / jnp.sum(qn, axis=1, keepdims=True)
        q_ref[...] = q.astype(q_ref.dtype)


def _pick_block_n(n, target=512):
    """Largest row tile (multiple of 8, dividing n) up to `target`; prefer a
    grid of >= 2 along the 'parallel' axis so both v7x TensorCores get work."""
    cands = [b for b in range(8, min(n, target) + 1, 8) if n % b == 0]
    if not cands:
        return n
    multi = [b for b in cands if n // b >= 2]
    return max(multi) if multi else max(cands)


def _pick_block_k(n, target=512):
    """Contraction tile along N: multiple of 128 (adj lane dim) or the full N."""
    if n <= target:
        return n
    cands = [b for b in range(128, target + 1, 128) if n % b == 0]
    return max(cands) if cands else n


def dec_forward(x, adj, w, b, mu, *, alpha=0.1, block_n=None, block_k=None):
    N, F = x.shape
    D = w.shape[1]
    K = mu.shape[0]

    if block_n is None:
        block_n = _pick_block_n(N)
    if block_k is None:
        block_k = _pick_block_k(N)
    assert N % block_n == 0 and N % block_k == 0

    # bf16 operands for the MXU (halves adj/x HBM traffic); f32 accumulation
    # inside the kernel.  Bias and cluster centers stay f32.
    # TODO(synk): in the real EGT_DEC, size/pad F and D to multiples of 128
    # for full MXU width.
    x_bf = x.astype(jnp.bfloat16)
    adj_bf = adj.astype(jnp.bfloat16)
    w_bf = w.astype(jnp.bfloat16)
    mu_t = jnp.transpose(mu).astype(jnp.float32)             # (D, K) for z@mu^T

    grid = (N // block_n, N // block_k)                      # (rows, contraction)

    z, q = pl.pallas_call(
        functools.partial(_dec_fused_kernel, alpha=alpha),
        out_shape=(
            jax.ShapeDtypeStruct((N, D), jnp.float32),
            jax.ShapeDtypeStruct((N, K), jnp.float32),
        ),
        grid=grid,
        in_specs=[
            pl.BlockSpec((block_k, F), lambda i, k: (k, 0)),        # x rows
            pl.BlockSpec((block_n, block_k), lambda i, k: (i, k)),  # adj tile
            pl.BlockSpec((F, D), lambda i, k: (0, 0)),              # W
            pl.BlockSpec((1, D), lambda i, k: (0, 0)),              # b
            pl.BlockSpec((D, K), lambda i, k: (0, 0)),              # mu^T
        ],
        out_specs=(
            pl.BlockSpec((block_n, D), lambda i, k: (i, 0)),        # z
            pl.BlockSpec((block_n, K), lambda i, k: (i, 0)),        # q
        ),
        scratch_shapes=[pltpu.VMEM((block_n, D), jnp.float32)],     # z accumulator
        compiler_params=pltpu.CompilerParams(
            dimension_semantics=("parallel", "arbitrary"),
            vmem_limit_bytes=64 * 1024 * 1024,
        ),
    )(x_bf, adj_bf, w_bf, b, mu_t)
    return z, q


def _reference(x, adj, w, b, mu, alpha):
    z = (adj @ x) @ w + b
    dist2 = jnp.sum((z[:, None, :] - mu[None, :, :]) ** 2, axis=2)
    q = 1.0 / (1.0 + dist2 / alpha + 1e-08)
    q = q ** (alpha + 1.0) / 2.0
    q = q / jnp.sum(q, axis=1, keepdims=True)
    return z, q


if __name__ == "__main__":
    # Small deterministic shapes consistent with DEC's forward defaults:
    # N nodes, node_width F, nhid D (=128 default), n_clusters K (=14 default).
    N, F, D, K = 256, 16, 128, 14
    alpha = 0.1

    key = jax.random.PRNGKey(0)
    kx, ka, kw, kb, km = jax.random.split(key, 5)

    x = jax.random.normal(kx, (N, F), dtype=jnp.float32)
    adj_raw = jax.random.uniform(ka, (N, N), dtype=jnp.float32)
    adj = (adj_raw > 0.8).astype(jnp.float32)
    adj = adj / jnp.maximum(adj.sum(axis=1, keepdims=True), 1.0)  # row-normalized
    w = jax.random.normal(kw, (F, D), dtype=jnp.float32) * 0.1
    b = jax.random.normal(kb, (1, D), dtype=jnp.float32) * 0.01
    mu = jax.random.normal(km, (K, D), dtype=jnp.float32)  # cluster centers

    fwd = jax.jit(functools.partial(dec_forward, alpha=alpha))
    z, q = fwd(x, adj, w, b, mu)
    jax.block_until_ready((z, q))

    z_ref, q_ref = _reference(x, adj, w, b, mu, alpha)
    assert z.shape == (N, D) and q.shape == (N, K)
    # Tolerances account for bf16 MXU operands (f32 accumulation) and the
    # approximate EUP reciprocal in the Student-t kernel.
    assert jnp.allclose(z, z_ref, rtol=2e-2, atol=2e-2)
    assert jnp.allclose(q, q_ref, rtol=1e-2, atol=1e-2)
    assert jnp.allclose(jnp.sum(q, axis=1), 1.0, atol=1e-4)

    print("KERNEL_OK")
</pallas_src>

<mosaic_0001>
module attributes {stable_mosaic.version = 11 : i64} {
  func.func @_dec_fused_kernel(%arg0: i32, %arg1: i32, %arg2: memref<256x16xbf16, #tpu.memory_space<vmem>>, %arg3: memref<128x256xbf16, #tpu.memory_space<vmem>>, %arg4: memref<16x128xbf16, #tpu.memory_space<vmem>>, %arg5: memref<1x128xf32, #tpu.memory_space<vmem>>, %arg6: memref<128x14xf32, #tpu.memory_space<vmem>>, %arg7: memref<128x128xf32, #tpu.memory_space<vmem>>, %arg8: memref<128x14xf32, #tpu.memory_space<vmem>>, %arg9: memref<128x128xf32, #tpu.memory_space<vmem>>) attributes {dimension_semantics = [#tpu.dimension_semantics<parallel>, #tpu.dimension_semantics<arbitrary>], iteration_bounds = array<i64: 2, 1>, scalar_prefetch = 0 : i64, scratch_operands = 1 : i64, tpu.core_type = #tpu.core_type<tc>, window_params = [{transform_indices = @transform_0, window_bounds = array<i64: 256, 16>}, {transform_indices = @transform_1, window_bounds = array<i64: 128, 256>}, {pipeline_mode = #tpu.pipeline_mode<synchronous>, transform_indices = @transform_2, window_bounds = array<i64: 16, 128>}, {pipeline_mode = #tpu.pipeline_mode<synchronous>, transform_indices = @transform_3, window_bounds = array<i64: 1, 128>}, {pipeline_mode = #tpu.pipeline_mode<synchronous>, transform_indices = @transform_4, window_bounds = array<i64: 128, 14>}, {transform_indices = @transform_5, window_bounds = array<i64: 128, 128>}, {transform_indices = @transform_6, window_bounds = array<i64: 128, 14>}]} {
    %c0_i32 = arith.constant 0 : i32
    %0 = arith.cmpi eq, %arg1, %c0_i32 : i32
    %1 = arith.extui %0 : i1 to i32
    %c0_i32_0 = arith.constant 0 : i32
    %2 = arith.cmpi ne, %1, %c0_i32_0 : i32
    scf.if %2 {
      %cst_13 = arith.constant 0.000000e+00 : f32
      %15 = vector.broadcast %cst_13 : f32 to vector<128x128xf32>
      %c0_14 = arith.constant 0 : index
      %c0_15 = arith.constant 0 : index
      %16 = vector.load %arg9[%c0_14, %c0_15] : memref<128x128xf32, #tpu.memory_space<vmem>>, vector<128x128xf32>
      tpu.vector_store %arg9[%c0_14, %c0_15], %15 {strides = array<i32>} : memref<128x128xf32, #tpu.memory_space<vmem>>, vector<128x128xf32>,
    } else {
    }
    %c0 = arith.constant 0 : index
    %c0_1 = arith.constant 0 : index
    %3 = vector.load %arg2[%c0, %c0_1] : memref<256x16xbf16, #tpu.memory_space<vmem>>, vector<256x16xbf16>
    %c0_2 = arith.constant 0 : index
    %c0_3 = arith.constant 0 : index
    %4 = vector.load %arg4[%c0_2, %c0_3] : memref<16x128xbf16, #tpu.memory_space<vmem>>, vector<16x128xbf16>
    %cst = arith.constant dense<0.000000e+00> : vector<256x128xf32>
    %5 = tpu.matmul %3, %4, %cst {dimension_numbers = #tpu.dot_dimension_numbers<[1], [0], [0], [1], [0, 0, 1, 1], [], []>} : vector<256x16xbf16>, vector<16x128xbf16>, vector<256x128xf32> -> vector<256x128xf32>
    %c0_4 = arith.constant 0 : index
    %c0_5 = arith.constant 0 : index
    %6 = vector.load %arg9[%c0_4, %c0_5] : memref<128x128xf32, #tpu.memory_space<vmem>>, vector<128x128xf32>
    %c0_6 = arith.constant 0 : index
    %c0_7 = arith.constant 0 : index
    %7 = vector.load %arg3[%c0_6, %c0_7] : memref<128x256xbf16, #tpu.memory_space<vmem>>, vector<128x256xbf16>
    %8 = arith.truncf %5 : vector<256x128xf32> to vector<256x128xbf16>
    %cst_8 = arith.constant dense<0.000000e+00> : vector<128x128xf32>
    %9 = tpu.matmul %7, %8, %cst_8 {dimension_numbers = #tpu.dot_dimension_numbers<[1], [0], [0], [1], [0, 0, 1, 1], [], []>} : vector<128x256xbf16>, vector<256x128xbf16>, vector<128x128xf32> -> vector<128x128xf32>
    %10 = arith.addf %6, %9 : vector<128x128xf32>
    %c0_9 = arith.constant 0 : index
    %c0_10 = arith.constant 0 : index
    %11 = vector.load %arg9[%c0_9, %c0_10] : memref<128x128xf32, #tpu.memory_space<vmem>>, vector<128x128xf32>
    tpu.vector_store %arg9[%c0_9, %c0_10], %10 {strides = array<i32>} : memref<128x128xf32, #tpu.memory_space<vmem>>, vector<128x128xf32>,
    %c0_i32_11 = arith.constant 0 : i32
    %12 = arith.cmpi eq, %arg1, %c0_i32_11 : i32
    %13 = arith.extui %12 : i1 to i32
    %c0_i32_12 = arith.constant 0 : i32
    %14 = arith.cmpi ne, %13, %c0_i32_12 : i32
    scf.if %14 {
      %c0_13 = arith.constant 0 : index
      %c0_14 = arith.constant 0 : index
      %15 = vector.load %arg9[%c0_13, %c0_14] : memref<128x128xf32, #tpu.memory_space<vmem>>, vector<128x128xf32>
      %c0_15 = arith.constant 0 : index
      %c0_16 = arith.constant 0 : index
      %16 = vector.load %arg5[%c0_15, %c0_16] : memref<1x128xf32, #tpu.memory_space<vmem>>, vector<1x128xf32>
      %17 = vector.broadcast %16 : vector<1x128xf32> to vector<128x128xf32>
      %18 = arith.addf %15, %17 : vector<128x128xf32>
      %c0_17 = arith.constant 0 : index
      %c0_18 = arith.constant 0 : index
      %19 = vector.load %arg7[%c0_17, %c0_18] : memref<128x128xf32, #tpu.memory_space<vmem>>, vector<128x128xf32>
      tpu.vector_store %arg7[%c0_17, %c0_18], %18 {strides = array<i32>} : memref<128x128xf32, #tpu.memory_space<vmem>>, vector<128x128xf32>,
      %c0_19 = arith.constant 0 : index
      %c0_20 = arith.constant 0 : index
      %20 = vector.load %arg6[%c0_19, %c0_20] : memref<128x14xf32, #tpu.memory_space<vmem>>, vector<128x14xf32>
      %21 = arith.mulf %18, %18 : vector<128x128xf32>
      %cst_21 = arith.constant dense<0.000000e+00> : vector<128xf32>
      %22 = vector.multi_reduction <add>, %21, %cst_21 [1] : vector<128x128xf32> to vector<128xf32>
      %23 = vector.shape_cast %22 : vector<128xf32> to vector<128x1xf32>
      %24 = arith.mulf %20, %20 : vector<128x14xf32>
      %cst_22 = arith.constant dense<0.000000e+00> : vector<14xf32>
      %25 = vector.multi_reduction <add>, %24, %cst_22 [0] : vector<128x14xf32> to vector<14xf32>
      %26 = vector.shape_cast %25 : vector<14xf32> to vector<1x14xf32>
      %cst_23 = arith.constant dense<0.000000e+00> : vector<128x14xf32>
      %27 = tpu.matmul %18, %20, %cst_23 {dimension_numbers = #tpu.dot_dimension_numbers<[1], [0], [0], [1], [0, 0, 1, 1], [], []>} : vector<128x128xf32>, vector<128x14xf32>, vector<128x14xf32> -> vector<128x14xf32>
      %28 = vector.broadcast %23 : vector<128x1xf32> to vector<128x14xf32>
      %29 = vector.broadcast %26 : vector<1x14xf32> to vector<128x14xf32>
      %30 = arith.addf %28, %29 : vector<128x14xf32>
      %cst_24 = arith.constant 2.000000e+00 : f32
      %31 = vector.broadcast %cst_24 : f32 to vector<128x14xf32>
      %32 = arith.mulf %31, %27 : vector<128x14xf32>
      %33 = arith.subf %30, %32 : vector<128x14xf32>
      %cst_25 = arith.constant 0.000000e+00 : f32
      %34 = vector.broadcast %cst_25 : f32 to vector<128x14xf32>
      %35 = arith.maximumf %33, %34 : vector<128x14xf32>
      %cst_26 = arith.constant 1.000000e+01 : f32
      %36 = vector.broadcast %cst_26 : f32 to vector<128x14xf32>
      %37 = arith.mulf %35, %36 : vector<128x14xf32>
      %cst_27 = arith.constant 1.000000e+00 : f32
      %38 = vector.broadcast %cst_27 : f32 to vector<128x14xf32>
      %39 = arith.addf %38, %37 : vector<128x14xf32>
      %cst_28 = arith.constant 9.99999993E-9 : f32
      %40 = vector.broadcast %cst_28 : f32 to vector<128x14xf32>
      %41 = arith.addf %39, %40 : vector<128x14xf32>
      %42 = tpu.reciprocal %41 {approx = true} : vector<128x14xf32> -> vector<128x14xf32>
      %cst_29 = arith.constant 1.000000e-30 : f32
      %43 = vector.broadcast %cst_29 : f32 to vector<128x14xf32>
      %44 = arith.maximumf %42, %43 : vector<128x14xf32>
      %45 = math.log %44 : vector<128x14xf32>
      %cst_30 = arith.constant 1.100000e+00 : f32
      %46 = vector.broadcast %cst_30 : f32 to vector<128x14xf32>
      %47 = arith.mulf %46, %45 : vector<128x14xf32>
      %48 = math.exp %47 : vector<128x14xf32>
      %cst_31 = arith.constant dense<0.000000e+00> : vector<128xf32>
      %49 = vector.multi_reduction <add>, %48, %cst_31 [1] : vector<128x14xf32> to vector<128xf32>
      %50 = vector.shape_cast %49 : vector<128xf32> to vector<128x1xf32>
      %51 = vector.broadcast %50 : vector<128x1xf32> to vector<128x14xf32>
      %52 = arith.divf %48, %51 : vector<128x14xf32>
      %c0_32 = arith.constant 0 : index
      %c0_33 = arith.constant 0 : index
      %53 = vector.load %arg8[%c0_32, %c0_33] : memref<128x14xf32, #tpu.memory_space<vmem>>, vector<128x14xf32>
      tpu.vector_store %arg8[%c0_32, %c0_33], %52 {strides = array<i32>} : memref<128x14xf32, #tpu.memory_space<vmem>>, vector<128x14xf32>,
    } else {
    }
    return
  }
  func.func @transform_0(%arg0: i32, %arg1: i32) -> (i32, i32) {
    %c0_i32 = arith.constant 0 : i32
    %c0_i32_0 = arith.constant 0 : i32
    return %arg1, %c0_i32 : i32, i32
  }
  func.func @transform_1(%arg0: i32, %arg1: i32) -> (i32, i32) {
    %c0_i32 = arith.constant 0 : i32
    return %arg0, %arg1 : i32, i32
  }
  func.func @transform_2(%arg0: i32, %arg1: i32) -> (i32, i32) {
    %c0_i32 = arith.constant 0 : i32
    %c0_i32_0 = arith.constant 0 : i32
    %c0_i32_1 = arith.constant 0 : i32
    return %c0_i32, %c0_i32_0 : i32, i32
  }
  func.func @transform_3(%arg0: i32, %arg1: i32) -> (i32, i32) {
    %c0_i32 = arith.constant 0 : i32
    %c0_i32_0 = arith.constant 0 : i32
    %c0_i32_1 = arith.constant 0 : i32
    return %c0_i32, %c0_i32_0 : i32, i32
  }
  func.func @transform_4(%arg0: i32, %arg1: i32) -> (i32, i32) {
    %c0_i32 = arith.constant 0 : i32
    %c0_i32_0 = arith.constant 0 : i32
    %c0_i32_1 = arith.constant 0 : i32
    return %c0_i32, %c0_i32_0 : i32, i32
  }
  func.func @transform_5(%arg0: i32, %arg1: i32) -> (i32, i32) {
    %c0_i32 = arith.constant 0 : i32
    %c0_i32_0 = arith.constant 0 : i32
    return %arg0, %c0_i32 : i32, i32
  }
  func.func @transform_6(%arg0: i32, %arg1: i32) -> (i32, i32) {
    %c0_i32 = arith.constant 0 : i32
    %c0_i32_0 = arith.constant 0 : i32
    return %arg0, %c0_i32 : i32, i32
  }
}

</mosaic_0001>

<llo_original>
// kernel: dec_forward.1
$region0: #{dec_forward.1}
  #allocation0 [shape = 'u32[]', space=smem, size = 0x4, offset = 0x4, fixed_abs, tag = 'smem constant byte address 0x4 - core index']
  #allocation1 [shape = 'u32[144,128]{1,0:T(1,128)}', space=vmem, size = 0x12000, scoped, tag = 'internal scratch']
  #allocation2 [shape = 'f32[128,128]{1,0:T(8,128)}', space=vmem, size = 0x10000, scoped, tag = 'scratch operand']
  %s0 = inlined_call_operand.hbm [shape: bf16[256,16], index: 0, kind: input, shape index: {}]
  %s1 = inlined_call_operand.hbm [shape: bf16[256,256], index: 1, kind: input, shape index: {}]
  %s2 = inlined_call_operand.hbm [shape: bf16[16,128], index: 2, kind: input, shape index: {}]
  %s3 = inlined_call_operand.hbm [shape: f32[1,128], index: 3, kind: input, shape index: {}]
  %s4 = inlined_call_operand.hbm [shape: f32[128,14], index: 4, kind: input, shape index: {}]
  %s5 = inlined_call_operand.hbm [shape: f32[256,128], index: 5, kind: output, shape index: {0}]
  %s6 = inlined_call_operand.hbm [shape: f32[256,14], index: 6, kind: output, shape index: {1}]
  %7 = xla_tuple %s5, %s6
  %s8 = sld [smem:[#allocation0]]
  $region89: #{dec_forward.1} parent=0
    _
  %s10 = ssub.s32 1, %s8
  %s11 = scalar_select 0, %s10, %s8
  $region1: #{dec_forward.1} parent=0
    #allocation3 [shape = 'u8[65536]{0}', space=vmem, size = 0x10000, scoped, tag = 'input window, operand 0, single buffered']
    #allocation4 [shape = 's32[2]{0}', space=sflag, size = 0x8, scoped, tag = 'scoped memory for dec_forward.1']
    #allocation5 [shape = 's32[2]{0}', space=sflag, size = 0x8, scoped, tag = 'scoped memory for dec_forward.1']
    #allocation6 [shape = 'u8[131072]{0}', space=vmem, size = 0x20000, scoped, tag = 'input window, operand 1']
    #allocation7 [shape = 's32[2]{0}', space=sflag, size = 0x8, scoped, tag = 'scoped memory for dec_forward.1']
    #allocation8 [shape = 'u8[4096]{0}', space=vmem, size = 0x1000, scoped, tag = 'input window, operand 2, single buffered']
    #allocation9 [shape = 'u8[512]{0}', space=vmem, size = 0x400, scoped, tag = 'input window, operand 3, single buffered']
    #allocation10 [shape = 's32[1]{0}', space=sflag, size = 0x4, scoped, tag = 'scoped memory for dec_forward.1']
    #allocation11 [shape = 'u8[65536]{0}', space=vmem, size = 0x10000, scoped, tag = 'input window, operand 4, single buffered']
    #allocation12 [shape = 'u8[131072]{0}', space=vmem, size = 0x20000, scoped, tag = 'output window, operand 0']
    #allocation13 [shape = 'u8[131072]{0}', space=vmem, size = 0x20000, scoped, tag = 'output window, operand 1']
    #allocation14 [shape = 's32[2]{0}', space=sflag, size = 0x8, scoped, tag = 'scoped memory for dec_forward.1']
    %12 = vsyncpa [#allocation4], 0
    %13 = vsyncpa [#allocation7], 0
    %s14 = scalar_lea.sflag [#allocation7], 1
    %15 = vsyncpa %s14, 0
    %16 = vsyncpa [#allocation10], 0
    %17 = vsyncpa [#allocation5], 0
    %s18 = scalar_lea.sflag [#allocation5], 1
    %19 = vsyncpa %s18, 0
    %20 = vsyncpa [#allocation14], 0
    %s21 = scalar_lea.sflag [#allocation14], 1
    %22 = vsyncpa %s21, 0
    loop: start=0, step=1, limit=4
    $region2: #{dec_forward.1} parent=1 // loop_pre_header
      _
    $region3: #{dec_forward.1} parent=1 // loop_header
      %s24 = sphi 0, %s28
      %p25 = scmp.ge.s32.totalorder %s24, 4
      %s31 = sphi 0, %s43
      %s32 = sphi 0, %s39
      %s33 = sphi 0, %s31
      %s34 = sphi 0, %s32
      %s35 = sphi 0, %s33
      %s36 = sphi 0, %s34
      %s46 = sphi 0, %s48
      %s49 = sphi 0, %s46
      %s50 = sphi 0, %s49
      %s66 = sphi 0, %s50
      %s74 = sphi 0, %s76
      %s77 = sphi 0, %s74
      %s78 = sphi 0, %s77
      %s94 = sphi 0, %s78
      %s98 = sphi 0, %s98
      %s100 = sphi 0, %s98
      %s101 = sphi 0, %s100
      %s115 = sphi 0, %s101
      %s119 = sphi 0, %s119
      %s121 = sphi 0, %s119
      %s122 = sphi 0, %s121
      %s136 = sphi 0, %s122
      %s140 = sphi 0, %s140
      %s142 = sphi 0, %s140
      %s143 = sphi 0, %s142
      %s157 = sphi 0, %s143
      %s163 = sphi 0, %s165
      %s166 = sphi 0, %s163
      %s167 = sphi 0, %s166
      %s183 = sphi 0, %s167
      %s189 = sphi 0, %s191
      %s192 = sphi 0, %s189
      %s193 = sphi 0, %s192
      %s209 = sphi 0, %s193
    $region4: #{dec_forward.1} parent=1 // loop_header_branch
      %27 = sbr.rel (%p25) target = $region8
    $region5: #{dec_forward.1} parent=1 // loop_body
      %s29 = ssub.s32 %s24, 1
      %s30 = ssub.s32 %s24, 2
      %s37 = sadd.s32 1, %s32
      %p38 = scmp.ge.s32.totalorder %s37, 1
      %s39 = scalar_select %p38, 0, %s37
      %s40 = sadd.s32 1, %s31
      %s41 = scalar_select %p38, %s40, %s31
      %p42 = scmp.ge.s32.totalorder %s41, 2
      %s43 = scalar_select %p42, 0, %s41
      %s44 = ssub.s32 %s32, %s39
      %p45 = scmp.eq.s32.totalorder %s44, 0
      %s47 = sadd.s32 %s46, 1
      %s48 = scalar_select %p45, %s46, %s47
      %p51 = pneg %p45
      %p52 = scmp.eq.s32.totalorder %s24, 1
      %p53 = por %p51, %p52
      %p54 = scmp.ne.s32.totalorder %s46, %s49
      %p55 = scmp.eq.s32.totalorder %s24, 0
      %p56 = por %p54, %p55
      %p57 = scmp.ne.s32.totalorder %s46, %s49
      %p58 = scmp.eq.s32.totalorder %s29, 1
      %p59 = por %p57, %p58
      %p60 = scmp.ne.s32.totalorder %s49, %s50
      %p61 = scmp.eq.s32.totalorder %s29, 0
      %p62 = por %p60, %p61
      %p63 = scmp.ne.s32.totalorder %s49, %s50
      %p64 = scmp.eq.s32.totalorder %s30, 1
      %p65 = por %p63, %p64
      %p67 = scmp.ne.s32.totalorder %s50, %s66
      %p68 = scmp.eq.s32.totalorder %s30, 0
      %p69 = por %p67, %p68
      %s70 = ssub.s32 %s31, %s43
      %s71 = ssub.s32 %s32, %s39
      %s72 = sor.u32 %s70, %s71
      %p73 = scmp.eq.s32.totalorder %s72, 0
      %s75 = sadd.s32 %s74, 1
      %s76 = scalar_select %p73, %s74, %s75
      %p79 = pneg %p73
      %p80 = scmp.eq.s32.totalorder %s24, 1
      %p81 = por %p79, %p80
      %p82 = scmp.ne.s32.totalorder %s74, %s77
      %p83 = scmp.eq.s32.totalorder %s24, 0
      %p84 = por %p82, %p83
      %p85 = scmp.ne.s32.totalorder %s74, %s77
      %p86 = scmp.eq.s32.totalorder %s29, 1
      %p87 = por %p85, %p86
      %p88 = scmp.ne.s32.totalorder %s77, %s78
      %p89 = scmp.eq.s32.totalorder %s29, 0
      %p90 = por %p88, %p89
      %p91 = scmp.ne.s32.totalorder %s77, %s78
      %p92 = scmp.eq.s32.totalorder %s30, 1
      %p93 = por %p91, %p92
      %p95 = scmp.ne.s32.totalorder %s78, %s94
      %p96 = scmp.eq.s32.totalorder %s30, 0
      %p97 = por %p95, %p96
      %s99 = sadd.s32 %s98, 1
      %p102 = scmp.eq.s32.totalorder %s24, 1
      %p103 = scmp.ne.s32.totalorder %s98, %s100
      %p104 = scmp.eq.s32.totalorder %s24, 0
      %p105 = por %p103, %p104
      %p106 = scmp.ne.s32.totalorder %s98, %s100
      %p107 = scmp.eq.s32.totalorder %s29, 1
      %p108 = por %p106, %p107
      %p109 = scmp.ne.s32.totalorder %s100, %s101
      %p110 = scmp.eq.s32.totalorder %s29, 0
      %p111 = por %p109, %p110
      %p112 = scmp.ne.s32.totalorder %s100, %s101
      %p113 = scmp.eq.s32.totalorder %s30, 1
      %p114 = por %p112, %p113
      %p116 = scmp.ne.s32.totalorder %s101, %s115
      %p117 = scmp.eq.s32.totalorder %s30, 0
      %p118 = por %p116, %p117
      %s120 = sadd.s32 %s119, 1
      %p123 = scmp.eq.s32.totalorder %s24, 1
      %p124 = scmp.ne.s32.totalorder %s119, %s121
      %p125 = scmp.eq.s32.totalorder %s24, 0
      %p126 = por %p124, %p125
      %p127 = scmp.ne.s32.totalorder %s119, %s121
      %p128 = scmp.eq.s32.totalorder %s29, 1
      %p129 = por %p127, %p128
      %p130 = scmp.ne.s32.totalorder %s121, %s122
      %p131 = scmp.eq.s32.totalorder %s29, 0
      %p132 = por %p130, %p131
      %p133 = scmp.ne.s32.totalorder %s121, %s122
      %p134 = scmp.eq.s32.totalorder %s30, 1
      %p135 = por %p133, %p134
      %p137 = scmp.ne.s32.totalorder %s122, %s136
      %p138 = scmp.eq.s32.totalorder %s30, 0
      %p139 = por %p137, %p138
      %s141 = sadd.s32 %s140, 1
      %p144 = scmp.eq.s32.totalorder %s24, 1
      %p145 = scmp.ne.s32.totalorder %s140, %s142
      %p146 = scmp.eq.s32.totalorder %s24, 0
      %p147 = por %p145, %p146
      %p148 = scmp.ne.s32.totalorder %s140, %s142
      %p149 = scmp.eq.s32.totalorder %s29, 1
      %p150 = por %p148, %p149
      %p151 = scmp.ne.s32.totalorder %s142, %s143
      %p152 = scmp.eq.s32.totalorder %s29, 0
      %p153 = por %p151, %p152
      %p154 = scmp.ne.s32.totalorder %s142, %s143
      %p155 = scmp.eq.s32.totalorder %s30, 1
      %p156 = por %p154, %p155
      %p158 = scmp.ne.s32.totalorder %s143, %s157
      %p159 = scmp.eq.s32.totalorder %s30, 0
      %p160 = por %p158, %p159
      %s161 = ssub.s32 %s31, %s43
      %p162 = scmp.eq.s32.totalorder %s161, 0
      %s164 = sadd.s32 %s163, 1
      %s165 = scalar_select %p162, %s163, %s164
      %p168 = pneg %p162
      %p169 = scmp.eq.s32.totalorder %s24, 1
      %p170 = por %p168, %p169
      %p171 = scmp.ne.s32.totalorder %s163, %s166
      %p172 = scmp.eq.s32.totalorder %s24, 0
      %p173 = por %p171, %p172
      %p174 = scmp.ne.s32.totalorder %s163, %s166
      %p175 = scmp.eq.s32.totalorder %s29, 1
      %p176 = por %p174, %p175
      %p177 = scmp.ne.s32.totalorder %s166, %s167
      %p178 = scmp.eq.s32.totalorder %s29, 0
      %p179 = por %p177, %p178
      %p180 = scmp.ne.s32.totalorder %s166, %s167
      %p181 = scmp.eq.s32.totalorder %s30, 1
      %p182 = por %p180, %p181
      %p184 = scmp.ne.s32.totalorder %s167, %s183
      %p185 = scmp.eq.s32.totalorder %s30, 0
      %p186 = por %p184, %p185
      %s187 = ssub.s32 %s31, %s43
      %p188 = scmp.eq.s32.totalorder %s187, 0
      %s190 = sadd.s32 %s189, 1
      %s191 = scalar_select %p188, %s189, %s190
      %p194 = pneg %p188
      %p195 = scmp.eq.s32.totalorder %s24, 1
      %p196 = por %p194, %p195
      %p197 = scmp.ne.s32.totalorder %s189, %s192
      %p198 = scmp.eq.s32.totalorder %s24, 0
      %p199 = por %p197, %p198
      %p200 = scmp.ne.s32.totalorder %s189, %s192
      %p201 = scmp.eq.s32.totalorder %s29, 1
      %p202 = por %p200, %p201
      %p203 = scmp.ne.s32.totalorder %s192, %s193
      %p204 = scmp.eq.s32.totalorder %s29, 0
      %p205 = por %p203, %p204
      %p206 = scmp.ne.s32.totalorder %s192, %s193
      %p207 = scmp.eq.s32.totalorder %s30, 1
      %p208 = por %p206, %p207
      %p210 = scmp.ne.s32.totalorder %s193, %s209
      %p211 = scmp.eq.s32.totalorder %s30, 0
      %p212 = por %p210, %p211
      %p213 = scmp.le.s32.totalorder 1, %s24
      %p214 = scmp.lt.s32.totalorder %s24, 3
      %p215 = pnand %p213, %p214
      %p216 = pneg %p215
      // Predicated region
      $region9: #{dec_forward.1} parent=5 // pred_check
        _
      $region10: #{dec_forward.1} parent=5 // pred_check_branch
        %218 = sbr.rel (%p215) target = $region12
      $region11: #{dec_forward.1} parent=5 // pred_region
        %s219 = ssub.s32 %s24, 1
        // Predicated region
        $region13: #{dec_forward.1} parent=11 // pred_check
          %p220 = pneg %p62
        $region14: #{dec_forward.1} parent=11 // pred_check_branch
          %222 = sbr.rel (%p220) target = $region16
        $region15: #{dec_forward.1} parent=11 // pred_region
          %s223 = smul.u32 32, %s34
          %s225 = ssub.s32 2048, 2048
          %226 = vsyncadd [#allocation4], %s225
          %s227 = smul.addr %s223, 64
          %s228 = scalar_lea.hbm %s0, %s227
          %s229 = sshll.u32 [#allocation3], 4
          %s230 = int_to_ptr.vmem [resolvable:$true] %s229
          %235 = dma.hbm_to_vmem [thread:$0]  %s228, 2048, %s230, [#allocation4], 64, 64, 4
        $region16: #{dec_forward.1} parent=11 // pred_fallthru
          _
        // Predicated region
        $region17: #{dec_forward.1} parent=11 // pred_check
          %p236 = pneg %p111
        $region18: #{dec_forward.1} parent=11 // pred_check_branch
          %238 = sbr.rel (%p236) target = $region20
        $region19: #{dec_forward.1} parent=11 // pred_region
          %s240 = ssub.s32 128, 128
          %241 = vsyncadd [#allocation7], %s240
          %s242 = sshll.u32 [#allocation8], 4
          %s243 = int_to_ptr.vmem [resolvable:$true] %s242
          %248 = dma.hbm_to_vmem [thread:$0]  %s2, 128, %s243, [#allocation7], 64, 64, 4
        $region20: #{dec_forward.1} parent=11 // pred_fallthru
          _
        // Predicated region
        $region21: #{dec_forward.1} parent=11 // pred_check
          %p249 = pneg %p132
        $region22: #{dec_forward.1} parent=11 // pred_check_branch
          %251 = sbr.rel (%p249) target = $region24
        $region23: #{dec_forward.1} parent=11 // pred_region
          %s253 = ssub.s32 16, 16
          %254 = vsyncadd [#allocation10], %s253
          %s256 = sshll.u32 [#allocation9], 4
          %s257 = int_to_ptr.vmem [resolvable:$true] %s256
          %259 = dma.hbm_to_vmem [thread:$0]  %s3, 16, %s257, [#allocation10]
        $region24: #{dec_forward.1} parent=11 // pred_fallthru
          _
        // Predicated region
        $region25: #{dec_forward.1} parent=11 // pred_check
          %p260 = pneg %p153
        $region26: #{dec_forward.1} parent=11 // pred_check_branch
          %262 = sbr.rel (%p260) target = $region28
        $region27: #{dec_forward.1} parent=11 // pred_region
          %s264 = ssub.s32 2048, 2048
          %265 = vsyncadd [#allocation10], %s264
          %s266 = sshll.u32 [#allocation11], 4
          %s267 = int_to_ptr.vmem [resolvable:$true] %s266
          %272 = dma.hbm_to_vmem [thread:$0]  %s4, 2048, %s267, [#allocation10], 128, 128, 8
        $region28: #{dec_forward.1} parent=11 // pred_fallthru
          _
      $region12: #{dec_forward.1} parent=5 // pred_fallthru
        _
      %p273 = scmp.lt.s32.totalorder %s24, 2
      // Predicated region
      $region29: #{dec_forward.1} parent=5 // pred_check
        %p274 = pneg %p273
      $region30: #{dec_forward.1} parent=5 // pred_check_branch
        %276 = sbr.rel (%p274) target = $region32
      $region31: #{dec_forward.1} parent=5 // pred_region
        // Predicated region
        $region33: #{dec_forward.1} parent=31 // pred_check
          %p277 = pneg %p84
        $region34: #{dec_forward.1} parent=31 // pred_check_branch
          %279 = sbr.rel (%p277) target = $region36
        $region35: #{dec_forward.1} parent=31 // pred_region
          %s280 = sand.u32 %s24, 1
          %s281 = scalar_lea.sflag [#allocation7], %s280
          %s282 = sand.u32 %s74, 1
          %s283 = smul.addr %s282, 128
          %s284 = scalar_lea.vmem [#allocation6], %s283
          %s285 = smul.u32 16, %s31
          %s286 = smul.u32 2, %s32
          %s288 = ssub.s32 2048, 2048
          %289 = vsyncadd %s281, %s288
          %s290 = smul.addr %s285, 2
          %s291 = sadd.s32 %s286, %s290
          %s292 = smul.addr %s291, 64
          %s293 = scalar_lea.hbm %s1, %s292
          %s294 = sshll.u32 %s284, 4
          %s295 = int_to_ptr.vmem [resolvable:$true] %s294
          %300 = dma.hbm_to_vmem [thread:$0]  %s293, 2048, %s295, %s281, 128, 128, 8
        $region36: #{dec_forward.1} parent=31 // pred_fallthru
          _
      $region32: #{dec_forward.1} parent=5 // pred_fallthru
        _
      %p301 = scmp.le.s32.totalorder 1, %s24
      %p302 = scmp.lt.s32.totalorder %s24, 3
      %p303 = pnand %p301, %p302
      %p304 = pneg %p303
      // Predicated region
      $region37: #{dec_forward.1} parent=5 // pred_check
        _
      $region38: #{dec_forward.1} parent=5 // pred_check_branch
        %306 = sbr.rel (%p303) target = $region40
      $region39: #{dec_forward.1} parent=5 // pred_region
        %s307 = ssub.s32 %s24, 1
        // Predicated region
        $region41: #{dec_forward.1} parent=39 // pred_check
          %p308 = pneg %p62
        $region42: #{dec_forward.1} parent=39 // pred_check_branch
          %310 = sbr.rel (%p308) target = $region44
        $region43: #{dec_forward.1} parent=39 // pred_region
          %311 = dma.done [#allocation4], 2048
        $region44: #{dec_forward.1} parent=39 // pred_fallthru
          _
        %s312 = sand.u32 %s29, 1
        %s313 = scalar_lea.sflag [#allocation7], %s312
        %s314 = sand.u32 %s77, 1
        %s315 = smul.addr %s314, 128
        %s316 = scalar_lea.vmem [#allocation6], %s315
        // Predicated region
        $region45: #{dec_forward.1} parent=39 // pred_check
          %p317 = pneg %p90
        $region46: #{dec_forward.1} parent=39 // pred_check_branch
          %319 = sbr.rel (%p317) target = $region48
        $region47: #{dec_forward.1} parent=39 // pred_region
          %320 = dma.done %s313, 2048
        $region48: #{dec_forward.1} parent=39 // pred_fallthru
          _
        // Predicated region
        $region49: #{dec_forward.1} parent=39 // pred_check
          %p321 = pneg %p111
        $region50: #{dec_forward.1} parent=39 // pred_check_branch
          %323 = sbr.rel (%p321) target = $region52
        $region51: #{dec_forward.1} parent=39 // pred_region
          %324 = dma.done [#allocation7], 128
        $region52: #{dec_forward.1} parent=39 // pred_fallthru
          _
        // Predicated region
        $region53: #{dec_forward.1} parent=39 // pred_check
          %p325 = pneg %p132
        $region54: #{dec_forward.1} parent=39 // pred_check_branch
          %327 = sbr.rel (%p325) target = $region56
        $region55: #{dec_forward.1} parent=39 // pred_region
          %328 = dma.done [#allocation10], 16
        $region56: #{dec_forward.1} parent=39 // pred_fallthru
          _
        // Predicated region
        $region57: #{dec_forward.1} parent=39 // pred_check
          %p329 = pneg %p153
        $region58: #{dec_forward.1} parent=39 // pred_check_branch
          %331 = sbr.rel (%p329) target = $region60
        $region59: #{dec_forward.1} parent=39 // pred_region
          %332 = dma.done [#allocation10], 2048
        $region60: #{dec_forward.1} parent=39 // pred_fallthru
          _
        %p333 = pneg %p62
        %p334 = pneg %p59
        %s335 = sand.u32 %s29, 1
        %s336 = scalar_lea.sflag [#allocation7], %s335
        %s337 = sand.u32 %s77, 1
        %s338 = smul.addr %s337, 128
        %s339 = scalar_lea.vmem [#allocation6], %s338
        %p340 = pneg %p90
        %p341 = pneg %p87
        %p342 = pneg %p111
        %p343 = pneg %p108
        %p344 = pneg %p132
        %p345 = pneg %p129
        %p346 = pneg %p153
        %p347 = pneg %p150
        %p348 = pneg %p179
        %p349 = pneg %p176
        %s350 = sand.u32 %s166, 1
        %s351 = scalar_lea.sflag [#allocation5], %s350
        %s352 = sand.u32 %s166, 1
        %s353 = smul.addr %s352, 128
        %s354 = scalar_lea.vmem [#allocation12], %s353
        %p355 = pneg %p205
        %p356 = pneg %p202
        %s357 = sand.u32 %s192, 1
        %s358 = scalar_lea.sflag [#allocation14], %s357
        %s359 = sand.u32 %s192, 1
        %s360 = smul.addr %s359, 128
        %s361 = scalar_lea.vmem [#allocation13], %s360
        %s362 = smul.u32 32, %s34
        %s363 = smul.u32 16, %s33
        %s364 = smul.u32 2, %s34
        %s365 = smul.u32 16, %s33
        %s366 = smul.u32 16, %s33
        %p368 = scmp.eq.s32.totalorder %s34, 0
        // Predicated region
        $region61: #{dec_forward.1} parent=39 // pred_check
          %p369 = pneg %p368
        $region62: #{dec_forward.1} parent=39 // pred_check_branch
          %371 = sbr.rel (%p369) target = $region64
        $region63: #{dec_forward.1} parent=39 // pred_region
          %372 = vst [vmem:[#allocation2] sm:$0xff] 0.0
          %373 = vst [vmem:[#allocation2 + $0x8] sm:$0xff] 0.0
          %374 = vst [vmem:[#allocation2 + $0x10] sm:$0xff] 0.0
          %375 = vst [vmem:[#allocation2 + $0x18] sm:$0xff] 0.0
          %376 = vst [vmem:[#allocation2 + $0x20] sm:$0xff] 0.0
          %377 = vst [vmem:[#allocation2 + $0x28] sm:$0xff] 0.0
          %378 = vst [vmem:[#allocation2 + $0x30] sm:$0xff] 0.0
          %379 = vst [vmem:[#allocation2 + $0x38] sm:$0xff] 0.0
          %380 = vst [vmem:[#allocation2 + $0x40] sm:$0xff] 0.0
          %381 = vst [vmem:[#allocation2 + $0x48] sm:$0xff] 0.0
          %382 = vst [vmem:[#allocation2 + $0x50] sm:$0xff] 0.0
          %383 = vst [vmem:[#allocation2 + $0x58] sm:$0xff] 0.0
          %384 = vst [vmem:[#allocation2 + $0x60] sm:$0xff] 0.0
          %385 = vst [vmem:[#allocation2 + $0x68] sm:$0xff] 0.0
          %386 = vst [vmem:[#allocation2 + $0x70] sm:$0xff] 0.0
          %387 = vst [vmem:[#allocation2 + $0x78] sm:$0xff] 0.0
        $region64: #{dec_forward.1} parent=39 // pred_fallthru
          _
        %v388 = vld [vmem:[#allocation3] sm:$0xf]
        %v389 = vld [vmem:[#allocation3 + $0x4] sm:$0xf]
        %v390 = vld [vmem:[#allocation3 + $0x8] sm:$0xf]
        %v391 = vld [vmem:[#allocation3 + $0xc] sm:$0xf]
        %v392 = vld [vmem:[#allocation3 + $0x10] sm:$0xf]
        %v393 = vld [vmem:[#allocation3 + $0x14] sm:$0xf]
        %v394 = vld [vmem:[#allocation3 + $0x18] sm:$0xf]
        %v395 = vld [vmem:[#allocation3 + $0x1c] sm:$0xf]
        %v396 = vld [vmem:[#allocation3 + $0x20] sm:$0xf]
        %v397 = vld [vmem:[#allocation3 + $0x24] sm:$0xf]
        %v398 = vld [vmem:[#allocation3 + $0x28] sm:$0xf]
        %v399 = vld [vmem:[#allocation3 + $0x2c] sm:$0xf]
        %v400 = vld [vmem:[#allocation3 + $0x30] sm:$0xf]
        %v401 = vld [vmem:[#allocation3 + $0x34] sm:$0xf]
        %v402 = vld [vmem:[#allocation3 + $0x38] sm:$0xf]
        %v403 = vld [vmem:[#allocation3 + $0x3c] sm:$0xf]
        %v404 = vld [vmem:[#allocation3 + $0x40] sm:$0xf]
        %v405 = vld [vmem:[#allocation3 + $0x44] sm:$0xf]
        %v406 = vld [vmem:[#allocation3 + $0x48] sm:$0xf]
        %v407 = vld [vmem:[#allocation3 + $0x4c] sm:$0xf]
        %v408 = vld [vmem:[#allocation3 + $0x50] sm:$0xf]
        %v409 = vld [vmem:[#allocation3 + $0x54] sm:$0xf]
        %v410 = vld [vmem:[#allocation3 + $0x58] sm:$0xf]
        %v411 = vld [vmem:[#allocation3 + $0x5c] sm:$0xf]
        %v412 = vld [vmem:[#allocation3 + $0x60] sm:$0xf]
        %v413 = vld [vmem:[#allocation3 + $0x64] sm:$0xf]
        %v414 = vld [vmem:[#allocation3 + $0x68] sm:$0xf]
        %v415 = vld [vmem:[#allocation3 + $0x6c] sm:$0xf]
        %v416 = vld [vmem:[#allocation3 + $0x70] sm:$0xf]
        %v417 = vld [vmem:[#allocation3 + $0x74] sm:$0xf]
        %v418 = vld [vmem:[#allocation3 + $0x78] sm:$0xf]
        %v419 = vld [vmem:[#allocation3 + $0x7c] sm:$0xf]
        %v420 = vld [vmem:[#allocation8] sm:$0xf]
        %v421 = vld [vmem:[#allocation8 + $0x4] sm:$0xf]
        %v454 = vunpack.c.l.b16 %v388
        %v455 = vunpack.c.l.b16 %v389
        %v456 = vunpack.c.l.b16 %v390
        %v457 = vunpack.c.l.b16 %v391
        %v458 = vunpack.c.l.b16 %v392
        %v459 = vunpack.c.l.b16 %v393
        %v460 = vunpack.c.l.b16 %v394
        %v461 = vunpack.c.l.b16 %v395
        %v462 = vunpack.c.l.b16 %v396
        %v463 = vunpack.c.l.b16 %v397
        %v464 = vunpack.c.l.b16 %v398
        %v465 = vunpack.c.l.b16 %v399
        %v466 = vunpack.c.l.b16 %v400
        %v467 = vunpack.c.l.b16 %v401
        %v468 = vunpack.c.l.b16 %v402
        %v469 = vunpack.c.l.b16 %v403
        %v470 = vunpack.c.l.b16 %v404
        %v471 = vunpack.c.l.b16 %v405
        %v472 = vunpack.c.l.b16 %v406
        %v473 = vunpack.c.l.b16 %v407
        %v474 = vunpack.c.l.b16 %v408
        %v475 = vunpack.c.l.b16 %v409
        %v476 = vunpack.c.l.b16 %v410
        %v477 = vunpack.c.l.b16 %v411
        %v478 = vunpack.c.l.b16 %v412
        %v479 = vunpack.c.l.b16 %v413
        %v480 = vunpack.c.l.b16 %v414
        %v481 = vunpack.c.l.b16 %v415
        %v482 = vunpack.c.l.b16 %v416
        %v483 = vunpack.c.l.b16 %v417
        %v484 = vunpack.c.l.b16 %v418
        %v485 = vunpack.c.l.b16 %v419
        %v486 = vpack.c.b16 %v455, %v454
        %v487 = vpack.c.b16 %v457, %v456
        %v488 = vpack.c.b16 %v459, %v458
        %v489 = vpack.c.b16 %v461, %v460
        %v490 = vpack.c.b16 %v463, %v462
        %v491 = vpack.c.b16 %v465, %v464
        %v492 = vpack.c.b16 %v467, %v466
        %v493 = vpack.c.b16 %v469, %v468
        %v494 = vpack.c.b16 %v471, %v470
        %v495 = vpack.c.b16 %v473, %v472
        %v496 = vpack.c.b16 %v475, %v474
        %v497 = vpack.c.b16 %v477, %v476
        %v498 = vpack.c.b16 %v479, %v478
        %v499 = vpack.c.b16 %v481, %v480
        %v500 = vpack.c.b16 %v483, %v482
        %v501 = vpack.c.b16 %v485, %v484
        %v504 = vunpack.c.l.b16 %v420
        %v505 = vunpack.c.l.b16 %v421
        %v506 = vpack.c.b16 %v505, %v504
        %vm508 = vcmask 130048
        %v510 = vsel %vm508, %v486, 0
        %v513 = vsel %vm508, %v487, 0
        %v516 = vsel %vm508, %v488, 0
        %v519 = vsel %vm508, %v489, 0
        %v522 = vsel %vm508, %v490, 0
        %v525 = vsel %vm508, %v491, 0
        %v528 = vsel %vm508, %v492, 0
        %v531 = vsel %vm508, %v493, 0
        %v534 = vsel %vm508, %v494, 0
        %v537 = vsel %vm508, %v495, 0
        %v540 = vsel %vm508, %v496, 0
        %v543 = vsel %vm508, %v497, 0
        %v546 = vsel %vm508, %v498, 0
        %v549 = vsel %vm508, %v499, 0
        %v552 = vsel %vm508, %v500, 0
        %v555 = vsel %vm508, %v501, 0
        %557 = vmatprep.subr.bf16.mxu0 0
        %558 = vmatpush1.bf16.msra.mxu0 %v506
        %559 = vmatprep.subr.bf16.mxu0 0
        %560 = vmatpush1.bf16.msra.mxu0 0
        %561 = vmatprep.subr.bf16.mxu0 0
        %562 = vmatpush1.bf16.msra.mxu0 0
        %563 = vmatprep.subr.bf16.mxu0 0
        %564 = vmatpush1.bf16.msra.mxu0 0
        %565 = vmatprep.subr.bf16.mxu0 0
        %566 = vmatpush1.bf16.msra.mxu0 0
        %567 = vmatprep.subr.bf16.mxu0 0
        %568 = vmatpush1.bf16.msra.mxu0 0
        %569 = vmatprep.subr.bf16.mxu0 0
        %570 = vmatpush1.bf16.msra.mxu0 0
        %571 = vmatprep.subr.bf16.mxu0 0
        %572 = vmatpush1.bf16.msra.mxu0 0
        %573 = vmatprep.subr.bf16.mxu0 0
        %574 = vmatpush1.bf16.msra.mxu0 0
        %575 = vmatprep.subr.bf16.mxu0 0
        %576 = vmatpush1.bf16.msra.mxu0 0
        %577 = vmatprep.subr.bf16.mxu0 0
        %578 = vmatpush1.bf16.msra.mxu0 0
        %579 = vmatprep.subr.bf16.mxu0 0
        %580 = vmatpush1.bf16.msra.mxu0 0
        %581 = vmatprep.subr.bf16.mxu0 0
        %582 = vmatpush1.bf16.msra.mxu0 0
        %583 = vmatprep.subr.bf16.mxu0 0
        %584 = vmatpush1.bf16.msra.mxu0 0
        %585 = vmatprep.subr.bf16.mxu0 0
        %586 = vmatpush1.bf16.msra.mxu0 0
        %587 = vmatprep.subr.bf16.mxu0 0
        %588 = vmatpush1.bf16.msra.mxu0 0
        %589 = vmatprep.mubr.bf16.mxu0 0
        %590 = vmatmul.mubr.bf16.gmra.mrb[0].mxu0 %v510
        %v591 = vpop.f32.mrb[0].mxu0
        %v592 = vadd.f32 0.0, %v591
        %v593 = vpop.f32.mrb[0].mxu0
        %v594 = vpop.f32.mrb[0].mxu0
        %v595 = vadd.f32 0.0, %v594
        %v596 = vpop.f32.mrb[0].mxu0
        %597 = vmatprep.mubr.bf16.mxu0 0
        %598 = vmatmul.mubr.bf16.gmra.mrb[0].mxu0 %v513
        %v599 = vpop.f32.mrb[0].mxu0
        %v600 = vadd.f32 0.0, %v599
        %v601 = vpop.f32.mrb[0].mxu0
        %v602 = vpop.f32.mrb[0].mxu0
        %v603 = vadd.f32 0.0, %v602
        %v604 = vpop.f32.mrb[0].mxu0
        %605 = vmatprep.mubr.bf16.mxu0 0
        %606 = vmatmul.mubr.bf16.gmra.mrb[0].mxu0 %v516
        %v607 = vpop.f32.mrb[0].mxu0
        %v608 = vadd.f32 0.0, %v607
        %v609 = vpop.f32.mrb[0].mxu0
        %v610 = vpop.f32.mrb[0].mxu0
        %v611 = vadd.f32 0.0, %v610
        %v612 = vpop.f32.mrb[0].mxu0
        %613 = vmatprep.mubr.bf16.mxu0 0
        %614 = vmatmul.mubr.bf16.gmra.mrb[0].mxu0 %v519
        %v615 = vpop.f32.mrb[0].mxu0
        %v616 = vadd.f32 0.0, %v615
        %v617 = vpop.f32.mrb[0].mxu0
        %v618 = vpop.f32.mrb[0].mxu0
        %v619 = vadd.f32 0.0, %v618
        %v620 = vpop.f32.mrb[0].mxu0
        %621 = vmatprep.mubr.bf16.mxu0 0
        %622 = vmatmul.mubr.bf16.gmra.mrb[0].mxu0 %v522
        %v623 = vpop.f32.mrb[0].mxu0
        %v624 = vadd.f32 0.0, %v623
        %v625 = vpop.f32.mrb[0].mxu0
        %v626 = vpop.f32.mrb[0].mxu0
        %v627 = vadd.f32 0.0, %v626
        %v628 = vpop.f32.mrb[0].mxu0
        %629 = vmatprep.mubr.bf16.mxu0 0
        %630 = vmatmul.mubr.bf16.gmra.mrb[0].mxu0 %v525
        %v631 = vpop.f32.mrb[0].mxu0
        %v632 = vadd.f32 0.0, %v631
        %v633 = vpop.f32.mrb[0].mxu0
        %v634 = vpop.f32.mrb[0].mxu0
        %v635 = vadd.f32 0.0, %v634
        %v636 = vpop.f32.mrb[0].mxu0
        %637 = vmatprep.mubr.bf16.mxu0 0
        %638 = vmatmul.mubr.bf16.gmra.mrb[0].mxu0 %v528
        %v639 = vpop.f32.mrb[0].mxu0
        %v640 = vadd.f32 0.0, %v639
        %v641 = vpop.f32.mrb[0].mxu0
        %v642 = vpop.f32.mrb[0].mxu0
        %v643 = vadd.f32 0.0, %v642
        %v644 = vpop.f32.mrb[0].mxu0
        %645 = vmatprep.mubr.bf16.mxu0 0
        %646 = vmatmul.mubr.bf16.gmra.mrb[0].mxu0 %v531
        %v647 = vpop.f32.mrb[0].mxu0
        %v648 = vadd.f32 0.0, %v647
        %v649 = vpop.f32.mrb[0].mxu0
        %v650 = vpop.f32.mrb[0].mxu0
        %v651 = vadd.f32 0.0, %v650
        %v652 = vpop.f32.mrb[0].mxu0
        %653 = vmatprep.mubr.bf16.mxu0 0
        %654 = vmatmul.mubr.bf16.gmra.mrb[0].mxu0 %v534
        %v655 = vpop.f32.mrb[0].mxu0
        %v656 = vadd.f32 0.0, %v655
        %v657 = vpop.f32.mrb[0].mxu0
        %v658 = vpop.f32.mrb[0].mxu0
        %v659 = vadd.f32 0.0, %v658
        %v660 = vpop.f32.mrb[0].mxu0
        %661 = vmatprep.mubr.bf16.mxu0 0
        %662 = vmatmul.mubr.bf16.gmra.mrb[0].mxu0 %v537
        %v663 = vpop.f32.mrb[0].mxu0
        %v664 = vadd.f32 0.0, %v663
        %v665 = vpop.f32.mrb[0].mxu0
        %v666 = vpop.f32.mrb[0].mxu0
        %v667 = vadd.f32 0.0, %v666
        %v668 = vpop.f32.mrb[0].mxu0
        %669 = vmatprep.mubr.bf16.mxu0 0
        %670 = vmatmul.mubr.bf16.gmra.mrb[0].mxu0 %v540
        %v671 = vpop.f32.mrb[0].mxu0
        %v672 = vadd.f32 0.0, %v671
        %v673 = vpop.f32.mrb[0].mxu0
        %v674 = vpop.f32.mrb[0].mxu0
        %v675 = vadd.f32 0.0, %v674
        %v676 = vpop.f32.mrb[0].mxu0
        %677 = vmatprep.mubr.bf16.mxu0 0
        %678 = vmatmul.mubr.bf16.gmra.mrb[0].mxu0 %v543
        %v679 = vpop.f32.mrb[0].mxu0
        %v680 = vadd.f32 0.0, %v679
        %v681 = vpop.f32.mrb[0].mxu0
        %v682 = vpop.f32.mrb[0].mxu0
        %v683 = vadd.f32 0.0, %v682
        %v684 = vpop.f32.mrb[0].mxu0
        %685 = vmatprep.mubr.bf16.mxu0 0
        %686 = vmatmul.mubr.bf16.gmra.mrb[0].mxu0 %v546
        %v687 = vpop.f32.mrb[0].mxu0
        %v688 = vadd.f32 0.0, %v687
        %v689 = vpop.f32.mrb[0].mxu0
        %v690 = vpop.f32.mrb[0].mxu0
        %v691 = vadd.f32 0.0, %v690
        %v692 = vpop.f32.mrb[0].mxu0
        %693 = vmatprep.mubr.bf16.mxu0 0
        %694 = vmatmul.mubr.bf16.gmra.mrb[0].mxu0 %v549
        %v695 = vpop.f32.mrb[0].mxu0
        %v696 = vadd.f32 0.0, %v695
        %v697 = vpop.f32.mrb[0].mxu0
        %v698 = vpop.f32.mrb[0].mxu0
        %v699 = vadd.f32 0.0, %v698
        %v700 = vpop.f32.mrb[0].mxu0
        %701 = vmatprep.mubr.bf16.mxu0 0
        %702 = vmatmul.mubr.bf16.gmra.mrb[0].mxu0 %v552
        %v703 = vpop.f32.mrb[0].mxu0
        %v704 = vadd.f32 0.0, %v703
        %v705 = vpop.f32.mrb[0].mxu0
        %v706 = vpop.f32.mrb[0].mxu0
        %v707 = vadd.f32 0.0, %v706
        %v708 = vpop.f32.mrb[0].mxu0
        %709 = vmatprep.mubr.bf16.mxu0 0
        %710 = vmatmul.mubr.bf16.gmra.mrb[0].mxu0 %v555
        %v711 = vpop.f32.mrb[0].mxu0
        %v712 = vadd.f32 0.0, %v711
        %v713 = vpop.f32.mrb[0].mxu0
        %v714 = vpop.f32.mrb[0].mxu0
        %v715 = vadd.f32 0.0, %v714
        %v716 = vpop.f32.mrb[0].mxu0
        %717 = vdwg.mxu0
        %v718 = vld [vmem:[#allocation2] sm:$0xff]
        %v719 = vld [vmem:[#allocation2 + $0x8] sm:$0xff]
        %v720 = vld [vmem:[#allocation2 + $0x10] sm:$0xff]
        %v721 = vld [vmem:[#allocation2 + $0x18] sm:$0xff]
        %v722 = vld [vmem:[#allocation2 + $0x20] sm:$0xff]
        %v723 = vld [vmem:[#allocation2 + $0x28] sm:$0xff]
        %v724 = vld [vmem:[#allocation2 + $0x30] sm:$0xff]
        %v725 = vld [vmem:[#allocation2 + $0x38] sm:$0xff]
        %v726 = vld [vmem:[#allocation2 + $0x40] sm:$0xff]
        %v727 = vld [vmem:[#allocation2 + $0x48] sm:$0xff]
        %v728 = vld [vmem:[#allocation2 + $0x50] sm:$0xff]
        %v729 = vld [vmem:[#allocation2 + $0x58] sm:$0xff]
        %v730 = vld [vmem:[#allocation2 + $0x60] sm:$0xff]
        %v731 = vld [vmem:[#allocation2 + $0x68] sm:$0xff]
        %v732 = vld [vmem:[#allocation2 + $0x70] sm:$0xff]
        %v733 = vld [vmem:[#allocation2 + $0x78] sm:$0xff]
        %v734 = vld [vmem:[%s316] sm:$0xff]
        %v735 = vld [vmem:[%s316 + $0x8] sm:$0xff]
        %v736 = vld [vmem:[%s316 + $0x10] sm:$0xff]
        %v737 = vld [vmem:[%s316 + $0x18] sm:$0xff]
        %v738 = vld [vmem:[%s316 + $0x20] sm:$0xff]
        %v739 = vld [vmem:[%s316 + $0x28] sm:$0xff]
        %v740 = vld [vmem:[%s316 + $0x30] sm:$0xff]
        %v741 = vld [vmem:[%s316 + $0x38] sm:$0xff]
        %v742 = vld [vmem:[%s316 + $0x40] sm:$0xff]
        %v743 = vld [vmem:[%s316 + $0x48] sm:$0xff]
        %v744 = vld [vmem:[%s316 + $0x50] sm:$0xff]
        %v745 = vld [vmem:[%s316 + $0x58] sm:$0xff]
        %v746 = vld [vmem:[%s316 + $0x60] sm:$0xff]
        %v747 = vld [vmem:[%s316 + $0x68] sm:$0xff]
        %v748 = vld [vmem:[%s316 + $0x70] sm:$0xff]
        %v749 = vld [vmem:[%s316 + $0x78] sm:$0xff]
        %v750 = vpack.c.bf16 %v595, %v592
        %v751 = vpack.c.bf16 %v603, %v600
        %v752 = vpack.c.bf16 %v611, %v608
        %v753 = vpack.c.bf16 %v619, %v616
        %v754 = vpack.c.bf16 %v627, %v624
        %v755 = vpack.c.bf16 %v635, %v632
        %v756 = vpack.c.bf16 %v643, %v640
        %v757 = vpack.c.bf16 %v651, %v648
        %v758 = vpack.c.bf16 %v659, %v656
        %v759 = vpack.c.bf16 %v667, %v664
        %v760 = vpack.c.bf16 %v675, %v672
        %v761 = vpack.c.bf16 %v683, %v680
        %v762 = vpack.c.bf16 %v691, %v688
        %v763 = vpack.c.bf16 %v699, %v696
        %v764 = vpack.c.bf16 %v707, %v704
        %v765 = vpack.c.bf16 %v715, %v712
        %v782 = vunpack.c.l.b16 %v734
        %v783 = vunpack.c.h.b16 %v734
        %v784 = vunpack.c.l.b16 %v735
        %v785 = vunpack.c.h.b16 %v735
        %v786 = vunpack.c.l.b16 %v736
        %v787 = vunpack.c.h.b16 %v736
        %v788 = vunpack.c.l.b16 %v737
        %v789 = vunpack.c.h.b16 %v737
        %v790 = vunpack.c.l.b16 %v738
        %v791 = vunpack.c.h.b16 %v738
        %v792 = vunpack.c.l.b16 %v739
        %v793 = vunpack.c.h.b16 %v739
        %v794 = vunpack.c.l.b16 %v740
        %v795 = vunpack.c.h.b16 %v740
        %v796 = vunpack.c.l.b16 %v741
        %v797 = vunpack.c.h.b16 %v741
        %v798 = vunpack.c.l.b16 %v742
        %v799 = vunpack.c.h.b16 %v742
        %v800 = vunpack.c.l.b16 %v743
        %v801 = vunpack.c.h.b16 %v743
        %v802 = vunpack.c.l.b16 %v744
        %v803 = vunpack.c.h.b16 %v744
        %v804 = vunpack.c.l.b16 %v745
        %v805 = vunpack.c.h.b16 %v745
        %v806 = vunpack.c.l.b16 %v746
        %v807 = vunpack.c.h.b16 %v746
        %v808 = vunpack.c.l.b16 %v747
        %v809 = vunpack.c.h.b16 %v747
        %v810 = vunpack.c.l.b16 %v748
        %v811 = vunpack.c.h.b16 %v748
        %v812 = vunpack.c.l.b16 %v749
        %v813 = vunpack.c.h.b16 %v749
        %v814 = vpack.c.b16 %v784, %v782
        %v815 = vpack.c.b16 %v785, %v783
        %v816 = vpack.c.b16 %v788, %v786
        %v817 = vpack.c.b16 %v789, %v787
        %v818 = vpack.c.b16 %v792, %v790
        %v819 = vpack.c.b16 %v793, %v791
        %v820 = vpack.c.b16 %v796, %v794
        %v821 = vpack.c.b16 %v797, %v795
        %v822 = vpack.c.b16 %v800, %v798
        %v823 = vpack.c.b16 %v801, %v799
        %v824 = vpack.c.b16 %v804, %v802
        %v825 = vpack.c.b16 %v805, %v803
        %v826 = vpack.c.b16 %v808, %v806
        %v827 = vpack.c.b16 %v809, %v807
        %v828 = vpack.c.b16 %v812, %v810
        %v829 = vpack.c.b16 %v813, %v811
        %846 = vmatprep.subr.bf16.mxu0 0
        %847 = vmatpush1.bf16.msra.mxu0 %v750
        %848 = vmatprep.subr.bf16.mxu0 0
        %849 = vmatpush1.bf16.msra.mxu0 %v751
        %850 = vmatprep.subr.bf16.mxu0 0
        %851 = vmatpush1.bf16.msra.mxu0 %v752
        %852 = vmatprep.subr.bf16.mxu0 0
        %853 = vmatpush1.bf16.msra.mxu0 %v753
        %854 = vmatprep.subr.bf16.mxu0 0
        %855 = vmatpush1.bf16.msra.mxu0 %v754
        %856 = vmatprep.subr.bf16.mxu0 0
        %857 = vmatpush1.bf16.msra.mxu0 %v755
        %858 = vmatprep.subr.bf16.mxu0 0
        %859 = vmatpush1.bf16.msra.mxu0 %v756
        %860 = vmatprep.subr.bf16.mxu0 0
        %861 = vmatpush1.bf16.msra.mxu0 %v757
        %862 = vmatprep.subr.bf16.mxu0 0
        %863 = vmatpush1.bf16.msra.mxu0 %v758
        %864 = vmatprep.subr.bf16.mxu0 0
        %865 = vmatpush1.bf16.msra.mxu0 %v759
        %866 = vmatprep.subr.bf16.mxu0 0
        %867 = vmatpush1.bf16.msra.mxu0 %v760
        %868 = vmatprep.subr.bf16.mxu0 0
        %869 = vmatpush1.bf16.msra.mxu0 %v761
        %870 = vmatprep.subr.bf16.mxu0 0
        %871 = vmatpush1.bf16.msra.mxu0 %v762
        %872 = vmatprep.subr.bf16.mxu0 0
        %873 = vmatpush1.bf16.msra.mxu0 %v763
        %874 = vmatprep.subr.bf16.mxu0 0
        %875 = vmatpush1.bf16.msra.mxu0 %v764
        %876 = vmatprep.subr.bf16.mxu0 0
        %877 = vmatpush1.bf16.msra.mxu0 %v765
        %878 = vmatprep.mubr.bf16.mxu0 %v815
        %879 = vmatmul.mubr.bf16.gmra.mrb[0].mxu0 %v814
        %v880 = vpop.f32.mrb[0].mxu0
        %v881 = vadd.f32 0.0, %v880
        %v882 = vpop.f32.mrb[0].mxu0
        %v883 = vpop.f32.mrb[0].mxu0
        %v884 = vadd.f32 0.0, %v883
        %v885 = vpop.f32.mrb[0].mxu0
        %886 = vmatprep.mubr.bf16.mxu0 %v817
        %887 = vmatmul.mubr.bf16.gmra.mrb[0].mxu0 %v816
        %v888 = vpop.f32.mrb[0].mxu0
        %v889 = vadd.f32 0.0, %v888
        %v890 = vpop.f32.mrb[0].mxu0
        %v891 = vpop.f32.mrb[0].mxu0
        %v892 = vadd.f32 0.0, %v891
        %v893 = vpop.f32.mrb[0].mxu0
        %894 = vmatprep.mubr.bf16.mxu0 %v819
        %895 = vmatmul.mubr.bf16.gmra.mrb[0].mxu0 %v818
        %v896 = vpop.f32.mrb[0].mxu0
        %v897 = vadd.f32 0.0, %v896
        %v898 = vpop.f32.mrb[0].mxu0
        %v899 = vpop.f32.mrb[0].mxu0
        %v900 = vadd.f32 0.0, %v899
        %v901 = vpop.f32.mrb[0].mxu0
        %902 = vmatprep.mubr.bf16.mxu0 %v821
        %903 = vmatmul.mubr.bf16.gmra.mrb[0].mxu0 %v820
        %v904 = vpop.f32.mrb[0].mxu0
        %v905 = vadd.f32 0.0, %v904
        %v906 = vpop.f32.mrb[0].mxu0
        %v907 = vpop.f32.mrb[0].mxu0
        %v908 = vadd.f32 0.0, %v907
        %v909 = vpop.f32.mrb[0].mxu0
        %910 = vmatprep.mubr.bf16.mxu0 %v823
        %911 = vmatmul.mubr.bf16.gmra.mrb[0].mxu0 %v822
        %v912 = vpop.f32.mrb[0].mxu0
        %v913 = vadd.f32 0.0, %v912
        %v914 = vpop.f32.mrb[0].mxu0
        %v915 = vpop.f32.mrb[0].mxu0
        %v916 = vadd.f32 0.0, %v915
        %v917 = vpop.f32.mrb[0].mxu0
        %918 = vmatprep.mubr.bf16.mxu0 %v825
        %919 = vmatmul.mubr.bf16.gmra.mrb[0].mxu0 %v824
        %v920 = vpop.f32.mrb[0].mxu0
        %v921 = vadd.f32 0.0, %v920
        %v922 = vpop.f32.mrb[0].mxu0
        %v923 = vpop.f32.mrb[0].mxu0
        %v924 = vadd.f32 0.0, %v923
        %v925 = vpop.f32.mrb[0].mxu0
        %926 = vmatprep.mubr.bf16.mxu0 %v827
        %927 = vmatmul.mubr.bf16.gmra.mrb[0].mxu0 %v826
        %v928 = vpop.f32.mrb[0].mxu0
        %v929 = vadd.f32 0.0, %v928
        %v930 = vpop.f32.mrb[0].mxu0
        %v931 = vpop.f32.mrb[0].mxu0
        %v932 = vadd.f32 0.0, %v931
        %v933 = vpop.f32.mrb[0].mxu0
        %934 = vmatprep.mubr.bf16.mxu0 %v829
        %935 = vmatmul.mubr.bf16.gmra.mrb[0].mxu0 %v828
        %v936 = vpop.f32.mrb[0].mxu0
        %v937 = vadd.f32 0.0, %v936
        %v938 = vpop.f32.mrb[0].mxu0
        %v939 = vpop.f32.mrb[0].mxu0
        %v940 = vadd.f32 0.0, %v939
        %v941 = vpop.f32.mrb[0].mxu0
        %942 = vdwg.mxu0
        %v943 = vadd.f32 %v718, %v881
        %v944 = vadd.f32 %v719, %v884
        %v945 = vadd.f32 %v720, %v889
        %v946 = vadd.f32 %v721, %v892
        %v947 = vadd.f32 %v722, %v897
        %v948 = vadd.f32 %v723, %v900
        %v949 = vadd.f32 %v724, %v905
        %v950 = vadd.f32 %v725, %v908
        %v951 = vadd.f32 %v726, %v913
        %v952 = vadd.f32 %v727, %v916
        %v953 = vadd.f32 %v728, %v921
        %v954 = vadd.f32 %v729, %v924
        %v955 = vadd.f32 %v730, %v929
        %v956 = vadd.f32 %v731, %v932
        %v957 = vadd.f32 %v732, %v937
        %v958 = vadd.f32 %v733, %v940
        %959 = vst [vmem:[#allocation2] sm:$0xff] %v943
        %960 = vst [vmem:[#allocation2 + $0x8] sm:$0xff] %v944
        %961 = vst [vmem:[#allocation2 + $0x10] sm:$0xff] %v945
        %962 = vst [vmem:[#allocation2 + $0x18] sm:$0xff] %v946
        %963 = vst [vmem:[#allocation2 + $0x20] sm:$0xff] %v947
        %964 = vst [vmem:[#allocation2 + $0x28] sm:$0xff] %v948
        %965 = vst [vmem:[#allocation2 + $0x30] sm:$0xff] %v949
        %966 = vst [vmem:[#allocation2 + $0x38] sm:$0xff] %v950
        %967 = vst [vmem:[#allocation2 + $0x40] sm:$0xff] %v951
        %968 = vst [vmem:[#allocation2 + $0x48] sm:$0xff] %v952
        %969 = vst [vmem:[#allocation2 + $0x50] sm:$0xff] %v953
        %970 = vst [vmem:[#allocation2 + $0x58] sm:$0xff] %v954
        %971 = vst [vmem:[#allocation2 + $0x60] sm:$0xff] %v955
        %972 = vst [vmem:[#allocation2 + $0x68] sm:$0xff] %v956
        %973 = vst [vmem:[#allocation2 + $0x70] sm:$0xff] %v957
        %974 = vst [vmem:[#allocation2 + $0x78] sm:$0xff] %v958
        // Predicated region
        $region65: #{dec_forward.1} parent=39 // pred_check
          %p975 = pneg %p368
        $region66: #{dec_forward.1} parent=39 // pred_check_branch
          %977 = sbr.rel (%p975) target = $region68
        $region67: #{dec_forward.1} parent=39 // pred_region
          %v978 = vld [vmem:[#allocation2] sm:$0xff]
          %v979 = vld [vmem:[#allocation2 + $0x8] sm:$0xff]
          %v980 = vld [vmem:[#allocation2 + $0x10] sm:$0xff]
          %v981 = vld [vmem:[#allocation2 + $0x18] sm:$0xff]
          %v982 = vld [vmem:[#allocation2 + $0x20] sm:$0xff]
          %v983 = vld [vmem:[#allocation2 + $0x28] sm:$0xff]
          %v984 = vld [vmem:[#allocation2 + $0x30] sm:$0xff]
          %v985 = vld [vmem:[#allocation2 + $0x38] sm:$0xff]
          %v986 = vld [vmem:[#allocation2 + $0x40] sm:$0xff]
          %v987 = vld [vmem:[#allocation2 + $0x48] sm:$0xff]
          %v988 = vld [vmem:[#allocation2 + $0x50] sm:$0xff]
          %v989 = vld [vmem:[#allocation2 + $0x58] sm:$0xff]
          %v990 = vld [vmem:[#allocation2 + $0x60] sm:$0xff]
          %v991 = vld [vmem:[#allocation2 + $0x68] sm:$0xff]
          %v992 = vld [vmem:[#allocation2 + $0x70] sm:$0xff]
          %v993 = vld [vmem:[#allocation2 + $0x78] sm:$0xff]
          %v994 = vld [vmem:[#allocation9] sm:$0x1]
          %v996 = vlaneseq
          %v997 = vshrl.u32 %v996, 7
          %v998 = vsub.s32 0, %v997
          %v999 = vrot.slane %v994, %v998
          %v1001 = vadd.f32 %v978, %v999
          %v1002 = vadd.f32 %v979, %v999
          %v1003 = vadd.f32 %v980, %v999
          %v1004 = vadd.f32 %v981, %v999
          %v1005 = vadd.f32 %v982, %v999
          %v1006 = vadd.f32 %v983, %v999
          %v1007 = vadd.f32 %v984, %v999
          %v1008 = vadd.f32 %v985, %v999
          %v1009 = vadd.f32 %v986, %v999
          %v1010 = vadd.f32 %v987, %v999
          %v1011 = vadd.f32 %v988, %v999
          %v1012 = vadd.f32 %v989, %v999
          %v1013 = vadd.f32 %v990, %v999
          %v1014 = vadd.f32 %v991, %v999
          %v1015 = vadd.f32 %v992, %v999
          %v1016 = vadd.f32 %v993, %v999
          %1017 = vst [vmem:[%s354] sm:$0xff] %v1001
          %1018 = vst [vmem:[%s354 + $0x8] sm:$0xff] %v1002
          %1019 = vst [vmem:[%s354 + $0x10] sm:$0xff] %v1003
          %1020 = vst [vmem:[%s354 + $0x18] sm:$0xff] %v1004
          %1021 = vst [vmem:[%s354 + $0x20] sm:$0xff] %v1005
          %1022 = vst [vmem:[%s354 + $0x28] sm:$0xff] %v1006
          %1023 = vst [vmem:[%s354 + $0x30] sm:$0xff] %v1007
          %1024 = vst [vmem:[%s354 + $0x38] sm:$0xff] %v1008
          %1025 = vst [vmem:[%s354 + $0x40] sm:$0xff] %v1009
          %1026 = vst [vmem:[%s354 + $0x48] sm:$0xff] %v1010
          %1027 = vst [vmem:[%s354 + $0x50] sm:$0xff] %v1011
          %1028 = vst [vmem:[%s354 + $0x58] sm:$0xff] %v1012
          %1029 = vst [vmem:[%s354 + $0x60] sm:$0xff] %v1013
          %1030 = vst [vmem:[%s354 + $0x68] sm:$0xff] %v1014
          %1031 = vst [vmem:[%s354 + $0x70] sm:$0xff] %v1015
          %1032 = vst [vmem:[%s354 + $0x78] sm:$0xff] %v1016
          %v1033 = vld [vmem:[#allocation11] sm:$0xff]
          %v1034 = vld [vmem:[#allocation11 + $0x8] sm:$0xff]
          %v1035 = vld [vmem:[#allocation11 + $0x10] sm:$0xff]
          %v1036 = vld [vmem:[#allocation11 + $0x18] sm:$0xff]
          %v1037 = vld [vmem:[#allocation11 + $0x20] sm:$0xff]
          %v1038 = vld [vmem:[#allocation11 + $0x28] sm:$0xff]
          %v1039 = vld [vmem:[#allocation11 + $0x30] sm:$0xff]
          %v1040 = vld [vmem:[#allocation11 + $0x38] sm:$0xff]
          %v1041 = vld [vmem:[#allocation11 + $0x40] sm:$0xff]
          %v1042 = vld [vmem:[#allocation11 + $0x48] sm:$0xff]
          %v1043 = vld [vmem:[#allocation11 + $0x50] sm:$0xff]
          %v1044 = vld [vmem:[#allocation11 + $0x58] sm:$0xff]
          %v1045 = vld [vmem:[#allocation11 + $0x60] sm:$0xff]
          %v1046 = vld [vmem:[#allocation11 + $0x68] sm:$0xff]
          %v1047 = vld [vmem:[#allocation11 + $0x70] sm:$0xff]
          %v1048 = vld [vmem:[#allocation11 + $0x78] sm:$0xff]
          %v1049 = vmul.f32 %v1001, %v1001
          %v1050 = vmul.f32 %v1002, %v1002
          %v1051 = vmul.f32 %v1003, %v1003
          %v1052 = vmul.f32 %v1004, %v1004
          %v1053 = vmul.f32 %v1005, %v1005
          %v1054 = vmul.f32 %v1006, %v1006
          %v1055 = vmul.f32 %v1007, %v1007
          %v1056 = vmul.f32 %v1008, %v1008
          %v1057 = vmul.f32 %v1009, %v1009
          %v1058 = vmul.f32 %v1010, %v1010
          %v1059 = vmul.f32 %v1011, %v1011
          %v1060 = vmul.f32 %v1012, %v1012
          %v1061 = vmul.f32 %v1013, %v1013
          %v1062 = vmul.f32 %v1014, %v1014
          %v1063 = vmul.f32 %v1015, %v1015
          %v1064 = vmul.f32 %v1016, %v1016
          %1065 = vadd.xlane.f32.xlu0 %v1049
          %v1066 = vpop.xlane.xlu0 %1065
          %1067 = vadd.xlane.f32.xlu0 %v1050
          %v1068 = vpop.xlane.xlu0 %1067
          %1069 = vadd.xlane.f32.xlu0 %v1051
          %v1070 = vpop.xlane.xlu0 %1069
          %1071 = vadd.xlane.f32.xlu0 %v1052
          %v1072 = vpop.xlane.xlu0 %1071
          %1073 = vadd.xlane.f32.xlu0 %v1053
          %v1074 = vpop.xlane.xlu0 %1073
          %1075 = vadd.xlane.f32.xlu0 %v1054
          %v1076 = vpop.xlane.xlu0 %1075
          %1077 = vadd.xlane.f32.xlu0 %v1055
          %v1078 = vpop.xlane.xlu0 %1077
          %1079 = vadd.xlane.f32.xlu0 %v1056
          %v1080 = vpop.xlane.xlu0 %1079
          %1081 = vadd.xlane.f32.xlu0 %v1057
          %v1082 = vpop.xlane.xlu0 %1081
          %1083 = vadd.xlane.f32.xlu0 %v1058
          %v1084 = vpop.xlane.xlu0 %1083
          %1085 = vadd.xlane.f32.xlu0 %v1059
          %v1086 = vpop.xlane.xlu0 %1085
          %1087 = vadd.xlane.f32.xlu0 %v1060
          %v1088 = vpop.xlane.xlu0 %1087
          %1089 = vadd.xlane.f32.xlu0 %v1061
          %v1090 = vpop.xlane.xlu0 %1089
          %1091 = vadd.xlane.f32.xlu0 %v1062
          %v1092 = vpop.xlane.xlu0 %1091
          %1093 = vadd.xlane.f32.xlu0 %v1063
          %v1094 = vpop.xlane.xlu0 %1093
          %1095 = vadd.xlane.f32.xlu0 %v1064
          %v1096 = vpop.xlane.xlu0 %1095
          %v1097 = vmul.f32 %v1033, %v1033
          %v1098 = vmul.f32 %v1034, %v1034
          %v1099 = vmul.f32 %v1035, %v1035
          %v1100 = vmul.f32 %v1036, %v1036
          %v1101 = vmul.f32 %v1037, %v1037
          %v1102 = vmul.f32 %v1038, %v1038
          %v1103 = vmul.f32 %v1039, %v1039
          %v1104 = vmul.f32 %v1040, %v1040
          %v1105 = vmul.f32 %v1041, %v1041
          %v1106 = vmul.f32 %v1042, %v1042
          %v1107 = vmul.f32 %v1043, %v1043
          %v1108 = vmul.f32 %v1044, %v1044
          %v1109 = vmul.f32 %v1045, %v1045
          %v1110 = vmul.f32 %v1046, %v1046
          %v1111 = vmul.f32 %v1047, %v1047
          %v1112 = vmul.f32 %v1048, %v1048
          %vm1113 = vcmask 113664
          %v1114 = vsel %vm1113, %v1097, 0.0
          %v1115 = vsel %vm1113, %v1098, 0.0
          %v1116 = vadd.f32 %v1114, %v1115
          %v1117 = vsel %vm1113, %v1099, 0.0
          %v1118 = vadd.f32 %v1116, %v1117
          %v1119 = vsel %vm1113, %v1100, 0.0
          %v1120 = vadd.f32 %v1118, %v1119
          %v1121 = vsel %vm1113, %v1101, 0.0
          %v1122 = vadd.f32 %v1120, %v1121
          %v1123 = vsel %vm1113, %v1102, 0.0
          %v1124 = vadd.f32 %v1122, %v1123
          %v1125 = vsel %vm1113, %v1103, 0.0
          %v1126 = vadd.f32 %v1124, %v1125
          %v1127 = vsel %vm1113, %v1104, 0.0
          %v1128 = vadd.f32 %v1126, %v1127
          %v1129 = vsel %vm1113, %v1105, 0.0
          %v1130 = vadd.f32 %v1128, %v1129
          %v1131 = vsel %vm1113, %v1106, 0.0
          %v1132 = vadd.f32 %v1130, %v1131
          %v1133 = vsel %vm1113, %v1107, 0.0
          %v1134 = vadd.f32 %v1132, %v1133
          %v1135 = vsel %vm1113, %v1108, 0.0
          %v1136 = vadd.f32 %v1134, %v1135
          %v1137 = vsel %vm1113, %v1109, 0.0
          %v1138 = vadd.f32 %v1136, %v1137
          %v1139 = vsel %vm1113, %v1110, 0.0
          %v1140 = vadd.f32 %v1138, %v1139
          %v1141 = vsel %vm1113, %v1111, 0.0
          %v1142 = vadd.f32 %v1140, %v1141
          %v1143 = vsel %vm1113, %v1112, 0.0
          %v1144 = vadd.f32 %v1142, %v1143
          %v1145 = vrot.slane %v1144, 4
          %v1146 = vadd.f32 %v1144, %v1145
          %v1147 = vrot.slane %v1146, 2
          %v1148 = vadd.f32 %v1146, %v1147
          %v1149 = vrot.slane %v1148, 1
          %v1150 = vadd.f32 %v1148, %v1149
          %1151 = vmatprep.subr.mxu0 0.0
          %1152 = vmatpush1.msra.mxu0 %v1033
          %1153 = vmatprep.subr.mxu0 0.0
          %1154 = vmatpush1.msra.mxu0 %v1034
          %1155 = vmatprep.subr.mxu0 0.0
          %1156 = vmatpush1.msra.mxu0 %v1035
          %1157 = vmatprep.subr.mxu0 0.0
          %1158 = vmatpush1.msra.mxu0 %v1036
          %1159 = vmatprep.subr.mxu0 0.0
          %1160 = vmatpush1.msra.mxu0 %v1037
          %1161 = vmatprep.subr.mxu0 0.0
          %1162 = vmatpush1.msra.mxu0 %v1038
          %1163 = vmatprep.subr.mxu0 0.0
          %1164 = vmatpush1.msra.mxu0 %v1039
          %1165 = vmatprep.subr.mxu0 0.0
          %1166 = vmatpush1.msra.mxu0 %v1040
          %1167 = vmatprep.subr.mxu0 0.0
          %1168 = vmatpush1.msra.mxu0 %v1041
          %1169 = vmatprep.subr.mxu0 0.0
          %1170 = vmatpush1.msra.mxu0 %v1042
          %1171 = vmatprep.subr.mxu0 0.0
          %1172 = vmatpush1.msra.mxu0 %v1043
          %1173 = vmatprep.subr.mxu0 0.0
          %1174 = vmatpush1.msra.mxu0 %v1044
          %1175 = vmatprep.subr.mxu0 0.0
          %1176 = vmatpush1.msra.mxu0 %v1045
          %1177 = vmatprep.subr.mxu0 0.0
          %1178 = vmatpush1.msra.mxu0 %v1046
          %1179 = vmatprep.subr.mxu0 0.0
          %1180 = vmatpush1.msra.mxu0 %v1047
          %1181 = vmatprep.subr.mxu0 0.0
          %1182 = vmatpush1.msra.mxu0 %v1048
          %1183 = vmatprep.subr.mxu0 0.0
          %1184 = vmatpush1.msra.mxu0 0.0
          %1185 = vmatprep.subr.mxu0 0.0
          %1186 = vmatpush1.msra.mxu0 0.0
          %1187 = vmatprep.subr.mxu0 0.0
          %1188 = vmatpush1.msra.mxu0 0.0
          %1189 = vmatprep.subr.mxu0 0.0
          %1190 = vmatpush1.msra.mxu0 0.0
          %1191 = vmatprep.subr.mxu0 0.0
          %1192 = vmatpush1.msra.mxu0 0.0
          %1193 = vmatprep.subr.mxu0 0.0
          %1194 = vmatpush1.msra.mxu0 0.0
          %1195 = vmatprep.subr.mxu0 0.0
          %1196 = vmatpush1.msra.mxu0 0.0
          %1197 = vmatprep.subr.mxu0 0.0
          %1198 = vmatpush1.msra.mxu0 0.0
          %1199 = vmatprep.subr.mxu0 0.0
          %1200 = vmatpush1.msra.mxu0 0.0
          %1201 = vmatprep.subr.mxu0 0.0
          %1202 = vmatpush1.msra.mxu0 0.0
          %1203 = vmatprep.subr.mxu0 0.0
          %1204 = vmatpush1.msra.mxu0 0.0
          %1205 = vmatprep.subr.mxu0 0.0
          %1206 = vmatpush1.msra.mxu0 0.0
          %1207 = vmatprep.subr.mxu0 0.0
          %1208 = vmatpush1.msra.mxu0 0.0
          %1209 = vmatprep.subr.mxu0 0.0
          %1210 = vmatpush1.msra.mxu0 0.0
          %1211 = vmatprep.subr.mxu0 0.0
          %1212 = vmatpush1.msra.mxu0 0.0
          %1213 = vmatprep.subr.mxu0 0.0
          %1214 = vmatpush1.msra.mxu0 0.0
          %1215 = vmatprep.mubr.f32.mxu0 0.0
          %1216 = vmatmul.mubr.f32.gmra.mrb[0].mxu0 %v1001
          %v1217 = vpop.f32.mrb[0].mxu0
          %v1218 = vadd.f32 0.0, %v1217
          %v1219 = vpop.f32.mrb[0].mxu0
          %1220 = vmatprep.mubr.f32.mxu0 0.0
          %1221 = vmatmul.mubr.f32.gmra.mrb[0].mxu0 %v1002
          %v1222 = vpop.f32.mrb[0].mxu0
          %v1223 = vadd.f32 0.0, %v1222
          %v1224 = vpop.f32.mrb[0].mxu0
          %1225 = vmatprep.mubr.f32.mxu0 0.0
          %1226 = vmatmul.mubr.f32.gmra.mrb[0].mxu0 %v1003
          %v1227 = vpop.f32.mrb[0].mxu0
          %v1228 = vadd.f32 0.0, %v1227
          %v1229 = vpop.f32.mrb[0].mxu0
          %1230 = vmatprep.mubr.f32.mxu0 0.0
          %1231 = vmatmul.mubr.f32.gmra.mrb[0].mxu0 %v1004
          %v1232 = vpop.f32.mrb[0].mxu0
          %v1233 = vadd.f32 0.0, %v1232
          %v1234 = vpop.f32.mrb[0].mxu0
          %1235 = vmatprep.mubr.f32.mxu0 0.0
          %1236 = vmatmul.mubr.f32.gmra.mrb[0].mxu0 %v1005
          %v1237 = vpop.f32.mrb[0].mxu0
          %v1238 = vadd.f32 0.0, %v1237
          %v1239 = vpop.f32.mrb[0].mxu0
          %1240 = vmatprep.mubr.f32.mxu0 0.0
          %1241 = vmatmul.mubr.f32.gmra.mrb[0].mxu0 %v1006
          %v1242 = vpop.f32.mrb[0].mxu0
          %v1243 = vadd.f32 0.0, %v1242
          %v1244 = vpop.f32.mrb[0].mxu0
          %1245 = vmatprep.mubr.f32.mxu0 0.0
          %1246 = vmatmul.mubr.f32.gmra.mrb[0].mxu0 %v1007
          %v1247 = vpop.f32.mrb[0].mxu0
          %v1248 = vadd.f32 0.0, %v1247
          %v1249 = vpop.f32.mrb[0].mxu0
          %1250 = vmatprep.mubr.f32.mxu0 0.0
          %1251 = vmatmul.mubr.f32.gmra.mrb[0].mxu0 %v1008
          %v1252 = vpop.f32.mrb[0].mxu0
          %v1253 = vadd.f32 0.0, %v1252
          %v1254 = vpop.f32.mrb[0].mxu0
          %1255 = vmatprep.mubr.f32.mxu0 0.0
          %1256 = vmatmul.mubr.f32.gmra.mrb[0].mxu0 %v1009
          %v1257 = vpop.f32.mrb[0].mxu0
          %v1258 = vadd.f32 0.0, %v1257
          %v1259 = vpop.f32.mrb[0].mxu0
          %1260 = vmatprep.mubr.f32.mxu0 0.0
          %1261 = vmatmul.mubr.f32.gmra.mrb[0].mxu0 %v1010
          %v1262 = vpop.f32.mrb[0].mxu0
          %v1263 = vadd.f32 0.0, %v1262
          %v1264 = vpop.f32.mrb[0].mxu0
          %1265 = vmatprep.mubr.f32.mxu0 0.0
          %1266 = vmatmul.mubr.f32.gmra.mrb[0].mxu0 %v1011
          %v1267 = vpop.f32.mrb[0].mxu0
          %v1268 = vadd.f32 0.0, %v1267
          %v1269 = vpop.f32.mrb[0].mxu0
          %1270 = vmatprep.mubr.f32.mxu0 0.0
          %1271 = vmatmul.mubr.f32.gmra.mrb[0].mxu0 %v1012
          %v1272 = vpop.f32.mrb[0].mxu0
          %v1273 = vadd.f32 0.0, %v1272
          %v1274 = vpop.f32.mrb[0].mxu0
          %1275 = vmatprep.mubr.f32.mxu0 0.0
          %1276 = vmatmul.mubr.f32.gmra.mrb[0].mxu0 %v1013
          %v1277 = vpop.f32.mrb[0].mxu0
          %v1278 = vadd.f32 0.0, %v1277
          %v1279 = vpop.f32.mrb[0].mxu0
          %1280 = vmatprep.mubr.f32.mxu0 0.0
          %1281 = vmatmul.mubr.f32.gmra.mrb[0].mxu0 %v1014
          %v1282 = vpop.f32.mrb[0].mxu0
          %v1283 = vadd.f32 0.0, %v1282
          %v1284 = vpop.f32.mrb[0].mxu0
          %1285 = vmatprep.mubr.f32.mxu0 0.0
          %1286 = vmatmul.mubr.f32.gmra.mrb[0].mxu0 %v1015
          %v1287 = vpop.f32.mrb[0].mxu0
          %v1288 = vadd.f32 0.0, %v1287
          %v1289 = vpop.f32.mrb[0].mxu0
          %1290 = vmatprep.mubr.f32.mxu0 0.0
          %1291 = vmatmul.mubr.f32.gmra.mrb[0].mxu0 %v1016
          %v1292 = vpop.f32.mrb[0].mxu0
          %v1293 = vadd.f32 0.0, %v1292
          %v1294 = vpop.f32.mrb[0].mxu0
          %1295 = vdwg.mxu0
          %v1296 = vadd.f32 %v1066, %v1150
          %v1297 = vadd.f32 %v1068, %v1150
          %v1298 = vadd.f32 %v1070, %v1150
          %v1299 = vadd.f32 %v1072, %v1150
          %v1300 = vadd.f32 %v1074, %v1150
          %v1301 = vadd.f32 %v1076, %v1150
          %v1302 = vadd.f32 %v1078, %v1150
          %v1303 = vadd.f32 %v1080, %v1150
          %v1304 = vadd.f32 %v1082, %v1150
          %v1305 = vadd.f32 %v1084, %v1150
          %v1306 = vadd.f32 %v1086, %v1150
          %v1307 = vadd.f32 %v1088, %v1150
          %v1308 = vadd.f32 %v1090, %v1150
          %v1309 = vadd.f32 %v1092, %v1150
          %v1310 = vadd.f32 %v1094, %v1150
          %v1311 = vadd.f32 %v1096, %v1150
          %v1312 = vmul.f32 %v1218, 2.0
          %v1313 = vmul.f32 %v1223, 2.0
          %v1314 = vmul.f32 %v1228, 2.0
          %v1315 = vmul.f32 %v1233, 2.0
          %v1316 = vmul.f32 %v1238, 2.0
          %v1317 = vmul.f32 %v1243, 2.0
          %v1318 = vmul.f32 %v1248, 2.0
          %v1319 = vmul.f32 %v1253, 2.0
          %v1320 = vmul.f32 %v1258, 2.0
          %v1321 = vmul.f32 %v1263, 2.0
          %v1322 = vmul.f32 %v1268, 2.0
          %v1323 = vmul.f32 %v1273, 2.0
          %v1324 = vmul.f32 %v1278, 2.0
          %v1325 = vmul.f32 %v1283, 2.0
          %v1326 = vmul.f32 %v1288, 2.0
          %v1327 = vmul.f32 %v1293, 2.0
          %v1328 = vsub.f32 %v1296, %v1312
          %v1329 = vsub.f32 %v1297, %v1313
          %v1330 = vsub.f32 %v1298, %v1314
          %v1331 = vsub.f32 %v1299, %v1315
          %v1332 = vsub.f32 %v1300, %v1316
          %v1333 = vsub.f32 %v1301, %v1317
          %v1334 = vsub.f32 %v1302, %v1318
          %v1335 = vsub.f32 %v1303, %v1319
          %v1336 = vsub.f32 %v1304, %v1320
          %v1337 = vsub.f32 %v1305, %v1321
          %v1338 = vsub.f32 %v1306, %v1322
          %v1339 = vsub.f32 %v1307, %v1323
          %v1340 = vsub.f32 %v1308, %v1324
          %v1341 = vsub.f32 %v1309, %v1325
          %v1342 = vsub.f32 %v1310, %v1326
          %v1343 = vsub.f32 %v1311, %v1327
          %v1344 = vmax.f32 %v1328, 0.0
          %v1345 = vmax.f32 %v1329, 0.0
          %v1346 = vmax.f32 %v1330, 0.0
          %v1347 = vmax.f32 %v1331, 0.0
          %v1348 = vmax.f32 %v1332, 0.0
          %v1349 = vmax.f32 %v1333, 0.0
          %v1350 = vmax.f32 %v1334, 0.0
          %v1351 = vmax.f32 %v1335, 0.0
          %v1352 = vmax.f32 %v1336, 0.0
          %v1353 = vmax.f32 %v1337, 0.0
          %v1354 = vmax.f32 %v1338, 0.0
          %v1355 = vmax.f32 %v1339, 0.0
          %v1356 = vmax.f32 %v1340, 0.0
          %v1357 = vmax.f32 %v1341, 0.0
          %v1358 = vmax.f32 %v1342, 0.0
          %v1359 = vmax.f32 %v1343, 0.0
          %v1360 = vmul.f32 %v1344, 10.0
          %v1361 = vmul.f32 %v1345, 10.0
          %v1362 = vmul.f32 %v1346, 10.0
          %v1363 = vmul.f32 %v1347, 10.0
          %v1364 = vmul.f32 %v1348, 10.0
          %v1365 = vmul.f32 %v1349, 10.0
          %v1366 = vmul.f32 %v1350, 10.0
          %v1367 = vmul.f32 %v1351, 10.0
          %v1368 = vmul.f32 %v1352, 10.0
          %v1369 = vmul.f32 %v1353, 10.0
          %v1370 = vmul.f32 %v1354, 10.0
          %v1371 = vmul.f32 %v1355, 10.0
          %v1372 = vmul.f32 %v1356, 10.0
          %v1373 = vmul.f32 %v1357, 10.0
          %v1374 = vmul.f32 %v1358, 10.0
          %v1375 = vmul.f32 %v1359, 10.0
          %v1376 = vadd.f32 %v1360, 1.0
          %v1377 = vadd.f32 %v1361, 1.0
          %v1378 = vadd.f32 %v1362, 1.0
          %v1379 = vadd.f32 %v1363, 1.0
          %v1380 = vadd.f32 %v1364, 1.0
          %v1381 = vadd.f32 %v1365, 1.0
          %v1382 = vadd.f32 %v1366, 1.0
          %v1383 = vadd.f32 %v1367, 1.0
          %v1384 = vadd.f32 %v1368, 1.0
          %v1385 = vadd.f32 %v1369, 1.0
          %v1386 = vadd.f32 %v1370, 1.0
          %v1387 = vadd.f32 %v1371, 1.0
          %v1388 = vadd.f32 %v1372, 1.0
          %v1389 = vadd.f32 %v1373, 1.0
          %v1390 = vadd.f32 %v1374, 1.0
          %v1391 = vadd.f32 %v1375, 1.0
          %v1392 = vadd.f32 %v1376, 1e-08
          %v1393 = vadd.f32 %v1377, 1e-08
          %v1394 = vadd.f32 %v1378, 1e-08
          %v1395 = vadd.f32 %v1379, 1e-08
          %v1396 = vadd.f32 %v1380, 1e-08
          %v1397 = vadd.f32 %v1381, 1e-08
          %v1398 = vadd.f32 %v1382, 1e-08
          %v1399 = vadd.f32 %v1383, 1e-08
          %v1400 = vadd.f32 %v1384, 1e-08
          %v1401 = vadd.f32 %v1385, 1e-08
          %v1402 = vadd.f32 %v1386, 1e-08
          %v1403 = vadd.f32 %v1387, 1e-08
          %v1404 = vadd.f32 %v1388, 1e-08
          %v1405 = vadd.f32 %v1389, 1e-08
          %v1406 = vadd.f32 %v1390, 1e-08
          %v1407 = vadd.f32 %v1391, 1e-08
          %v1408 = vrcp.pop %v1392
          %v1409 = vrcp.pop %v1393
          %v1410 = vrcp.pop %v1394
          %v1411 = vrcp.pop %v1395
          %v1412 = vrcp.pop %v1396
          %v1413 = vrcp.pop %v1397
          %v1414 = vrcp.pop %v1398
          %v1415 = vrcp.pop %v1399
          %v1416 = vrcp.pop %v1400
          %v1417 = vrcp.pop %v1401
          %v1418 = vrcp.pop %v1402
          %v1419 = vrcp.pop %v1403
          %v1420 = vrcp.pop %v1404
          %v1421 = vrcp.pop %v1405
          %v1422 = vrcp.pop %v1406
          %v1423 = vrcp.pop %v1407
          %v1424 = vmax.f32 %v1408, 1e-30
          %v1425 = vmax.f32 %v1409, 1e-30
          %v1426 = vmax.f32 %v1410, 1e-30
          %v1427 = vmax.f32 %v1411, 1e-30
          %v1428 = vmax.f32 %v1412, 1e-30
          %v1429 = vmax.f32 %v1413, 1e-30
          %v1430 = vmax.f32 %v1414, 1e-30
          %v1431 = vmax.f32 %v1415, 1e-30
          %v1432 = vmax.f32 %v1416, 1e-30
          %v1433 = vmax.f32 %v1417, 1e-30
          %v1434 = vmax.f32 %v1418, 1e-30
          %v1435 = vmax.f32 %v1419, 1e-30
          %v1436 = vmax.f32 %v1420, 1e-30
          %v1437 = vmax.f32 %v1421, 1e-30
          %v1438 = vmax.f32 %v1422, 1e-30
          %v1439 = vmax.f32 %v1423, 1e-30
          %v1440 = vlog2.pop %v1424
          %v1441 = vmul.f32 %v1440, 0.6931472
          %v1442 = vlog2.pop %v1425
          %v1443 = vmul.f32 %v1442, 0.6931472
          %v1444 = vlog2.pop %v1426
          %v1445 = vmul.f32 %v1444, 0.6931472
          %v1446 = vlog2.pop %v1427
          %v1447 = vmul.f32 %v1446, 0.6931472
          %v1448 = vlog2.pop %v1428
          %v1449 = vmul.f32 %v1448, 0.6931472
          %v1450 = vlog2.pop %v1429
          %v1451 = vmul.f32 %v1450, 0.6931472
          %v1452 = vlog2.pop %v1430
          %v1453 = vmul.f32 %v1452, 0.6931472
          %v1454 = vlog2.pop %v1431
          %v1455 = vmul.f32 %v1454, 0.6931472
          %v1456 = vlog2.pop %v1432
          %v1457 = vmul.f32 %v1456, 0.6931472
          %v1458 = vlog2.pop %v1433
          %v1459 = vmul.f32 %v1458, 0.6931472
          %v1460 = vlog2.pop %v1434
          %v1461 = vmul.f32 %v1460, 0.6931472
          %v1462 = vlog2.pop %v1435
          %v1463 = vmul.f32 %v1462, 0.6931472
          %v1464 = vlog2.pop %v1436
          %v1465 = vmul.f32 %v1464, 0.6931472
          %v1466 = vlog2.pop %v1437
          %v1467 = vmul.f32 %v1466, 0.6931472
          %v1468 = vlog2.pop %v1438
          %v1469 = vmul.f32 %v1468, 0.6931472
          %v1470 = vlog2.pop %v1439
          %v1471 = vmul.f32 %v1470, 0.6931472
          %v1472 = vmul.f32 %v1441, 1.1
          %v1473 = vmul.f32 %v1443, 1.1
          %v1474 = vmul.f32 %v1445, 1.1
          %v1475 = vmul.f32 %v1447, 1.1
          %v1476 = vmul.f32 %v1449, 1.1
          %v1477 = vmul.f32 %v1451, 1.1
          %v1478 = vmul.f32 %v1453, 1.1
          %v1479 = vmul.f32 %v1455, 1.1
          %v1480 = vmul.f32 %v1457, 1.1
          %v1481 = vmul.f32 %v1459, 1.1
          %v1482 = vmul.f32 %v1461, 1.1
          %v1483 = vmul.f32 %v1463, 1.1
          %v1484 = vmul.f32 %v1465, 1.1
          %v1485 = vmul.f32 %v1467, 1.1
          %v1486 = vmul.f32 %v1469, 1.1
          %v1487 = vmul.f32 %v1471, 1.1
          %v1488 = vmul.f32 %v1472, 1.442695
          %v1489 = vpow.pop %v1488
          %v1490 = vmul.f32 %v1473, 1.442695
          %v1491 = vpow.pop %v1490
          %v1492 = vmul.f32 %v1474, 1.442695
          %v1493 = vpow.pop %v1492
          %v1494 = vmul.f32 %v1475, 1.442695
          %v1495 = vpow.pop %v1494
          %v1496 = vmul.f32 %v1476, 1.442695
          %v1497 = vpow.pop %v1496
          %v1498 = vmul.f32 %v1477, 1.442695
          %v1499 = vpow.pop %v1498
          %v1500 = vmul.f32 %v1478, 1.442695
          %v1501 = vpow.pop %v1500
          %v1502 = vmul.f32 %v1479, 1.442695
          %v1503 = vpow.pop %v1502
          %v1504 = vmul.f32 %v1480, 1.442695
          %v1505 = vpow.pop %v1504
          %v1506 = vmul.f32 %v1481, 1.442695
          %v1507 = vpow.pop %v1506
          %v1508 = vmul.f32 %v1482, 1.442695
          %v1509 = vpow.pop %v1508
          %v1510 = vmul.f32 %v1483, 1.442695
          %v1511 = vpow.pop %v1510
          %v1512 = vmul.f32 %v1484, 1.442695
          %v1513 = vpow.pop %v1512
          %v1514 = vmul.f32 %v1485, 1.442695
          %v1515 = vpow.pop %v1514
          %v1516 = vmul.f32 %v1486, 1.442695
          %v1517 = vpow.pop %v1516
          %v1518 = vmul.f32 %v1487, 1.442695
          %v1519 = vpow.pop %v1518
          %v1520 = vsel %vm1113, %v1489, 0.0
          %1521 = vadd.xlane.f32.xlu0 %v1520
          %v1522 = vpop.xlane.xlu0 %1521
          %v1523 = vsel %vm1113, %v1491, 0.0
          %1524 = vadd.xlane.f32.xlu0 %v1523
          %v1525 = vpop.xlane.xlu0 %1524
          %v1526 = vsel %vm1113, %v1493, 0.0
          %1527 = vadd.xlane.f32.xlu0 %v1526
          %v1528 = vpop.xlane.xlu0 %1527
          %v1529 = vsel %vm1113, %v1495, 0.0
          %1530 = vadd.xlane.f32.xlu0 %v1529
          %v1531 = vpop.xlane.xlu0 %1530
          %v1532 = vsel %vm1113, %v1497, 0.0
          %1533 = vadd.xlane.f32.xlu0 %v1532
          %v1534 = vpop.xlane.xlu0 %1533
          %v1535 = vsel %vm1113, %v1499, 0.0
          %1536 = vadd.xlane.f32.xlu0 %v1535
          %v1537 = vpop.xlane.xlu0 %1536
          %v1538 = vsel %vm1113, %v1501, 0.0
          %1539 = vadd.xlane.f32.xlu0 %v1538
          %v1540 = vpop.xlane.xlu0 %1539
          %v1541 = vsel %vm1113, %v1503, 0.0
          %1542 = vadd.xlane.f32.xlu0 %v1541
          %v1543 = vpop.xlane.xlu0 %1542
          %v1544 = vsel %vm1113, %v1505, 0.0
          %1545 = vadd.xlane.f32.xlu0 %v1544
          %v1546 = vpop.xlane.xlu0 %1545
          %v1547 = vsel %vm1113, %v1507, 0.0
          %1548 = vadd.xlane.f32.xlu0 %v1547
          %v1549 = vpop.xlane.xlu0 %1548
          %v1550 = vsel %vm1113, %v1509, 0.0
          %1551 = vadd.xlane.f32.xlu0 %v1550
          %v1552 = vpop.xlane.xlu0 %1551
          %v1553 = vsel %vm1113, %v1511, 0.0
          %1554 = vadd.xlane.f32.xlu0 %v1553
          %v1555 = vpop.xlane.xlu0 %1554
          %v1556 = vsel %vm1113, %v1513, 0.0
          %1557 = vadd.xlane.f32.xlu0 %v1556
          %v1558 = vpop.xlane.xlu0 %1557
          %v1559 = vsel %vm1113, %v1515, 0.0
          %1560 = vadd.xlane.f32.xlu0 %v1559
          %v1561 = vpop.xlane.xlu0 %1560
          %v1562 = vsel %vm1113, %v1517, 0.0
          %1563 = vadd.xlane.f32.xlu0 %v1562
          %v1564 = vpop.xlane.xlu0 %1563
          %v1565 = vsel %vm1113, %v1519, 0.0
          %1566 = vadd.xlane.f32.xlu0 %v1565
          %v1567 = vpop.xlane.xlu0 %1566
          %v1568 = vrcp.pop %v1522
          %v1569 = vmul.f32 %v1489, %v1568
          %v1570 = vrcp.pop %v1525
          %v1571 = vmul.f32 %v1491, %v1570
          %v1572 = vrcp.pop %v1528
          %v1573 = vmul.f32 %v1493, %v1572
          %v1574 = vrcp.pop %v1531
          %v1575 = vmul.f32 %v1495, %v1574
          %v1576 = vrcp.pop %v1534
          %v1577 = vmul.f32 %v1497, %v1576
          %v1578 = vrcp.pop %v1537
          %v1579 = vmul.f32 %v1499, %v1578
          %v1580 = vrcp.pop %v1540
          %v1581 = vmul.f32 %v1501, %v1580
          %v1582 = vrcp.pop %v1543
          %v1583 = vmul.f32 %v1503, %v1582
          %v1584 = vrcp.pop %v1546
          %v1585 = vmul.f32 %v1505, %v1584
          %v1586 = vrcp.pop %v1549
          %v1587 = vmul.f32 %v1507, %v1586
          %v1588 = vrcp.pop %v1552
          %v1589 = vmul.f32 %v1509, %v1588
          %v1590 = vrcp.pop %v1555
          %v1591 = vmul.f32 %v1511, %v1590
          %v1592 = vrcp.pop %v1558
          %v1593 = vmul.f32 %v1513, %v1592
          %v1594 = vrcp.pop %v1561
          %v1595 = vmul.f32 %v1515, %v1594
          %v1596 = vrcp.pop %v1564
          %v1597 = vmul.f32 %v1517, %v1596
          %v1598 = vrcp.pop %v1567
          %v1599 = vmul.f32 %v1519, %v1598
          %1600 = vst.msk [vmem:[%s361] sm:$0xff] %vm1113, %v1569
          %1601 = vst.msk [vmem:[%s361 + $0x8] sm:$0xff] %vm1113, %v1571
          %1602 = vst.msk [vmem:[%s361 + $0x10] sm:$0xff] %vm1113, %v1573
          %1603 = vst.msk [vmem:[%s361 + $0x18] sm:$0xff] %vm1113, %v1575
          %1604 = vst.msk [vmem:[%s361 + $0x20] sm:$0xff] %vm1113, %v1577
          %1605 = vst.msk [vmem:[%s361 + $0x28] sm:$0xff] %vm1113, %v1579
          %1606 = vst.msk [vmem:[%s361 + $0x30] sm:$0xff] %vm1113, %v1581
          %1607 = vst.msk [vmem:[%s361 + $0x38] sm:$0xff] %vm1113, %v1583
          %1608 = vst.msk [vmem:[%s361 + $0x40] sm:$0xff] %vm1113, %v1585
          %1609 = vst.msk [vmem:[%s361 + $0x48] sm:$0xff] %vm1113, %v1587
          %1610 = vst.msk [vmem:[%s361 + $0x50] sm:$0xff] %vm1113, %v1589
          %1611 = vst.msk [vmem:[%s361 + $0x58] sm:$0xff] %vm1113, %v1591
          %1612 = vst.msk [vmem:[%s361 + $0x60] sm:$0xff] %vm1113, %v1593
          %1613 = vst.msk [vmem:[%s361 + $0x68] sm:$0xff] %vm1113, %v1595
          %1614 = vst.msk [vmem:[%s361 + $0x70] sm:$0xff] %vm1113, %v1597
          %1615 = vst.msk [vmem:[%s361 + $0x78] sm:$0xff] %vm1113, %v1599
        $region68: #{dec_forward.1} parent=39 // pred_fallthru
          _
        %s1616 = sand.u32 %s166, 1
        %s1617 = scalar_lea.sflag [#allocation5], %s1616
        %s1618 = sand.u32 %s166, 1
        %s1619 = smul.addr %s1618, 128
        %s1620 = scalar_lea.vmem [#allocation12], %s1619
        %s1621 = sand.u32 %s192, 1
        %s1622 = scalar_lea.sflag [#allocation14], %s1621
        %s1623 = sand.u32 %s192, 1
        %s1624 = smul.addr %s1623, 128
        %s1625 = scalar_lea.vmem [#allocation13], %s1624
        // Predicated region
        $region69: #{dec_forward.1} parent=39 // pred_check
          %p1626 = pneg %p176
        $region70: #{dec_forward.1} parent=39 // pred_check_branch
          %1628 = sbr.rel (%p1626) target = $region72
        $region71: #{dec_forward.1} parent=39 // pred_region
          %s1629 = smul.u32 16, %s33
          %s1631 = ssub.s32 2048, 2048
          %1632 = vsyncadd %s1617, %s1631
          %s1633 = smul.addr %s1629, 128
          %s1634 = scalar_lea.hbm %s5, %s1633
          %s1635 = sshll.u32 %s1620, 4
          %s1636 = int_to_ptr.vmem [resolvable:$true] %s1635
          %1641 = dma.vmem_to_hbm [thread:$0]  %s1636, 2048, %s1634, %s1617, 128, 128, 8
        $region72: #{dec_forward.1} parent=39 // pred_fallthru
          _
        // Predicated region
        $region73: #{dec_forward.1} parent=39 // pred_check
          %p1642 = pneg %p202
        $region74: #{dec_forward.1} parent=39 // pred_check_branch
          %1644 = sbr.rel (%p1642) target = $region76
        $region75: #{dec_forward.1} parent=39 // pred_region
          %s1645 = smul.u32 16, %s33
          %s1647 = ssub.s32 2048, 2048
          %1648 = vsyncadd %s1622, %s1647
          %s1649 = smul.addr %s1645, 128
          %s1650 = scalar_lea.hbm %s6, %s1649
          %s1651 = sshll.u32 %s1625, 4
          %s1652 = int_to_ptr.vmem [resolvable:$true] %s1651
          %1657 = dma.vmem_to_hbm [thread:$0]  %s1652, 2048, %s1650, %s1622, 128, 128, 8
        $region76: #{dec_forward.1} parent=39 // pred_fallthru
          _
      $region40: #{dec_forward.1} parent=5 // pred_fallthru
        _
      %p1658 = scmp.le.s32.totalorder 2, %s24
      // Predicated region
      $region77: #{dec_forward.1} parent=5 // pred_check
        %p1659 = pneg %p1658
      $region78: #{dec_forward.1} parent=5 // pred_check_branch
        %1661 = sbr.rel (%p1659) target = $region80
      $region79: #{dec_forward.1} parent=5 // pred_region
        %s1662 = ssub.s32 %s24, 2
        // Predicated region
        $region81: #{dec_forward.1} parent=79 // pred_check
          %p1663 = pneg %p182
        $region82: #{dec_forward.1} parent=79 // pred_check_branch
          %1665 = sbr.rel (%p1663) target = $region84
        $region83: #{dec_forward.1} parent=79 // pred_region
          %s1666 = sand.u32 %s167, 1
          %s1667 = scalar_lea.sflag [#allocation5], %s1666
          %s1668 = sand.u32 %s167, 1
          %s1669 = smul.addr %s1668, 128
          %s1670 = scalar_lea.vmem [#allocation12], %s1669
          %1671 = dma.done %s1667, 2048
        $region84: #{dec_forward.1} parent=79 // pred_fallthru
          _
        // Predicated region
        $region85: #{dec_forward.1} parent=79 // pred_check
          %p1672 = pneg %p208
        $region86: #{dec_forward.1} parent=79 // pred_check_branch
          %1674 = sbr.rel (%p1672) target = $region88
        $region87: #{dec_forward.1} parent=79 // pred_region
          %s1675 = sand.u32 %s193, 1
          %s1676 = scalar_lea.sflag [#allocation14], %s1675
          %s1677 = sand.u32 %s193, 1
          %s1678 = smul.addr %s1677, 128
          %s1679 = scalar_lea.vmem [#allocation13], %s1678
          %1680 = dma.done %s1676, 2048
        $region88: #{dec_forward.1} parent=79 // pred_fallthru
          _
      $region80: #{dec_forward.1} parent=5 // pred_fallthru
        _
    $region6: #{dec_forward.1} parent=1 // loop_footer
      %s28 = sadd.s32 1, %s24
    $region7: #{dec_forward.1} parent=1 // loop_footer_branch
      %23 = sbr.rel target = $region3
    $region8: #{dec_forward.1} parent=1 // loop_exit
      _
    %1681 = vsyncpa [#allocation4], 1
    %s1682 = scalar_lea.sflag [#allocation4], 1
    %1683 = vsyncpa %s1682, 1
    %1684 = vsyncpa [#allocation7], 1
    %s1685 = scalar_lea.sflag [#allocation7], 1
    %1686 = vsyncpa %s1685, 1
    %1687 = vsyncpa [#allocation10], 1
    %1688 = vsyncpa [#allocation5], 1
    %s1689 = scalar_lea.sflag [#allocation5], 1
    %1690 = vsyncpa %s1689, 1
    %1691 = vsyncpa [#allocation14], 1
    %s1692 = scalar_lea.sflag [#allocation14], 1
    %1693 = vsyncpa %s1692, 1

</llo_original>
